<compile_context>
chip_gen: v5e
topology: v5e:2x2
jax: 0.10.0
libtpu: 0.0.40
codegen_flags: <defaults>
</compile_context>

<pallas_src>
import math
import functools

import jax
import jax.numpy as jnp
from jax.experimental import pallas as pl
from jax.experimental.pallas import tpu as pltpu


def _round_up(x, m):
    return (x + m - 1) // m * m


# ----------------------------------------------------------------------------
# Fused conv kernel: in-VMEM im2col (static tap slices, concat along K) +
# one MXU matmul + fused bias / residual-add / activation epilogue.
# ----------------------------------------------------------------------------
def _apply_act(y, act):
    if act == "relu":
        return jnp.maximum(y, 0.0)
    if act == "sigmoid":
        return jax.nn.sigmoid(y)          # f32 epilogue
    return y


def _patches(x_ref, kh, kw, ho, wo):
    cin = x_ref.shape[-1]
    m = ho * wo
    cols = []
    for dy in range(kh):
        for dx in range(kw):
            cols.append(x_ref[0, dy:dy + ho, dx:dx + wo, :].reshape(m, cin))
    return cols[0] if len(cols) == 1 else jnp.concatenate(cols, axis=-1)


def _conv_kernel(x_ref, w_ref, b_ref, o_ref, *, kh, kw, ho, wo, act):
    p = _patches(x_ref, kh, kw, ho, wo)
    y = jnp.dot(p, w_ref[...], preferred_element_type=jnp.float32)
    y = _apply_act(y + b_ref[...], act)
    o_ref[...] = y.reshape(o_ref.shape).astype(o_ref.dtype)


def _conv_res_kernel(x_ref, w_ref, b_ref, r_ref, o_ref, *, kh, kw, ho, wo, act):
    p = _patches(x_ref, kh, kw, ho, wo)
    y = jnp.dot(p, w_ref[...], preferred_element_type=jnp.float32)
    y = y + b_ref[...]
    y = y + r_ref[...].reshape(ho * wo, r_ref.shape[-1]).astype(jnp.float32)
    y = _apply_act(y, act)
    o_ref[...] = y.reshape(o_ref.shape).astype(o_ref.dtype)


def _fused_conv(xp, wm, bias, *, kh, kw, ho, wo, act, residual, out_dtype):
    B, Hp, Wp, cin_p = xp.shape
    K, Np = wm.shape
    assert K == kh * kw * cin_p
    # Weight resident in VMEM for the whole grid when it fits; tile N only
    # when genuinely large (TN>=256 keeps the 256-wide MXU of v6e/v7x full).
    if Np <= 1024:
        TN = Np
    elif Np % 512 == 0:
        TN = 512
    elif Np % 256 == 0:
        TN = 256
    else:
        TN = 128
    grid = (B, Np // TN)

    in_specs = [
        pl.BlockSpec((1, Hp, Wp, cin_p), lambda b, j: (b, 0, 0, 0)),
        pl.BlockSpec((K, TN), lambda b, j: (0, j)),       # constant over b
        pl.BlockSpec((1, TN), lambda b, j: (0, j)),
    ]
    args = [xp, wm, bias]
    if residual is not None:
        in_specs.append(pl.BlockSpec((1, ho, wo, TN),
                                     lambda b, j: (b, 0, 0, j)))
        args.append(residual.astype(jnp.bfloat16))
        kernel = functools.partial(_conv_res_kernel, kh=kh, kw=kw,
                                   ho=ho, wo=wo, act=act)
    else:
        kernel = functools.partial(_conv_kernel, kh=kh, kw=kw,
                                   ho=ho, wo=wo, act=act)

    return pl.pallas_call(
        kernel,
        out_shape=jax.ShapeDtypeStruct((B, ho, wo, Np), out_dtype),
        grid_spec=pltpu.PrefetchScalarGridSpec(
            num_scalar_prefetch=0,
            grid=grid,
            in_specs=in_specs,
            out_specs=pl.BlockSpec((1, ho, wo, TN), lambda b, j: (b, 0, 0, j)),
        ),
        compiler_params=pltpu.CompilerParams(
            dimension_semantics=("parallel", "parallel"),
            vmem_limit_bytes=64 * 1024 * 1024),
    )(*args)


# ----------------------------------------------------------------------------
# Conv wrapper: spatial/lane padding and the stride-2 space-to-depth rewrite
# are cheap XLA glue; all FLOPs go through the fused Pallas kernel.
# ----------------------------------------------------------------------------
def _space_to_depth(x):
    B, H, W, C = x.shape
    x = x.reshape(B, H // 2, 2, W // 2, 2, C)
    x = x.transpose(0, 1, 3, 2, 4, 5)
    return x.reshape(B, H // 2, W // 2, 4 * C)


def conv2d(x, p, *, act="none", residual=None, out_dtype=jnp.bfloat16):
    B, H, W, C = x.shape
    if p["stride"] == 2:
        # 3x3 / stride-2 / pad-1 conv == space-to-depth + 2x2 stride-1 conv
        # with the weights re-packed once at init (see ParamFactory).
        assert C == p["cin_store"]
        if H % 2 or W % 2:
            x = jnp.pad(x, ((0, 0), (0, H % 2), (0, W % 2), (0, 0)))
        x = _space_to_depth(x)
        ho, wo = x.shape[1], x.shape[2]
        x = jnp.pad(x, ((0, 0), (1, 0), (1, 0), (0, 0)))   # asymmetric 'same'
    else:
        pad = p["pad"]
        ho, wo = H, W
        if pad:
            x = jnp.pad(x, ((0, 0), (pad, pad), (pad, pad), (0, 0)))
    cin_p = p["cin_p"]
    if x.shape[-1] < cin_p:                                 # lane padding
        x = jnp.pad(x, ((0, 0), (0, 0), (0, 0), (0, cin_p - x.shape[-1])))
    x = x.astype(jnp.bfloat16)
    return _fused_conv(x, p["wm"], p["b"], kh=p["kh"], kw=p["kw"],
                       ho=ho, wo=wo, act=act, residual=residual,
                       out_dtype=out_dtype)


def upsample2x(x):
    B, H, W, C = x.shape
    return jnp.broadcast_to(x[:, :, None, :, None, :],
                            (B, H, 2, W, 2, C)).reshape(B, 2 * H, 2 * W, C)


# ----------------------------------------------------------------------------
# Parameter init (RetinaNet.__init__ rules), pre-packed ONCE into the fused
# kernel's (K, Np) bf16 matmul layout (K = taps * padded_cin).
# ----------------------------------------------------------------------------
BACKBONE_CH = (16, 16, 32, 64, 128)


class ParamFactory:
    def __init__(self, seed=0):
        self.key = jax.random.PRNGKey(seed)

    def conv(self, kh, kw, cin, cout, *, stride=1, cin_store=None,
             zero=False, bias_fill=0.0, keep_raw=False):
        if cin_store is None:
            cin_store = cin          # channel width of the stored input
        Np = _round_up(cout, 128)
        if zero:
            w = jnp.zeros((kh, kw, cin, cout), jnp.float32)
        else:
            self.key, sub = jax.random.split(self.key)
            std = math.sqrt(2.0 / (kh * kw * cout))       # RetinaNet init
            w = std * jax.random.normal(sub, (kh, kw, cin, cout), jnp.float32)
        b = jnp.zeros((1, Np), jnp.float32).at[0, :cout].set(bias_fill)

        if stride == 1:
            cin_p = _round_up(cin_store, 128)
            wm = jnp.zeros((kh * kw, cin_p, Np), jnp.float32)
            wm = wm.at[:, :cin, :cout].set(w.reshape(kh * kw, cin, cout))
            meta = dict(kh=kh, kw=kw, pad=(kh - 1) // 2)
        else:
            # stride-2 3x3 pad-1 conv re-expressed on the space-to-depth input:
            # 2x2 taps over channel groups of size `cin_store`.
            assert stride == 2 and kh == 3 and kw == 3
            cin_p = _round_up(4 * cin_store, 128)
            wm = jnp.zeros((4, cin_p, Np), jnp.float32)
            for ty in range(2):
                for tx in range(2):
                    for py in range(2):
                        for px in range(2):
                            dy, dx = 2 * ty + py - 1, 2 * tx + px - 1
                            if 0 <= dy < 3 and 0 <= dx < 3:
                                g = py * 2 + px
                                wm = wm.at[ty * 2 + tx,
                                           g * cin_store:g * cin_store + cin,
                                           :cout].set(w[dy, dx])
            meta = dict(kh=2, kw=2, pad=0)

        T = wm.shape[0]
        out = {"wm": wm.reshape(T * cin_p, Np).astype(jnp.bfloat16),
               "b": b, "stride": stride, "cin_p": cin_p,
               "cin_store": cin_store, "cout": cout}
        out.update(meta)
        if keep_raw:
            out["w_raw"] = w
        return out


def init_params(num_classes, fpn_ch, num_anchors):
    pf = ParamFactory(0)
    s1, s2, s3, s4, s5 = BACKBONE_CH
    pad = lambda c: _round_up(c, 128)
    p = {}
    # TODO(synk): stand-in backbone (stride-2 conv+relu stack), not ResNet-50.
    p["stem"] = pf.conv(3, 3, 3, s1, stride=2, cin_store=3)
    p["c2"] = pf.conv(3, 3, s1, s2, stride=2, cin_store=pad(s1))
    p["c3"] = pf.conv(3, 3, s2, s3, stride=2, cin_store=pad(s2))
    p["c4"] = pf.conv(3, 3, s3, s4, stride=2, cin_store=pad(s3))
    p["c5"] = pf.conv(3, 3, s4, s5, stride=2, cin_store=pad(s4))
    # FPN
    p["lat3"] = pf.conv(1, 1, s3, fpn_ch)
    p["lat4"] = pf.conv(1, 1, s4, fpn_ch)
    p["lat5"] = pf.conv(1, 1, s5, fpn_ch)
    p["smooth3"] = pf.conv(3, 3, fpn_ch, fpn_ch)
    p["smooth4"] = pf.conv(3, 3, fpn_ch, fpn_ch)
    p["smooth5"] = pf.conv(3, 3, fpn_ch, fpn_ch)
    p["p6"] = pf.conv(3, 3, s5, fpn_ch, stride=2, cin_store=pad(s5))
    p["p7"] = pf.conv(3, 3, fpn_ch, fpn_ch, stride=2, cin_store=pad(fpn_ch))
    # heads (shared towers across pyramid levels)
    p["reg_tower"] = [pf.conv(3, 3, fpn_ch, fpn_ch) for _ in range(4)]
    p["cls_tower"] = [pf.conv(3, 3, fpn_ch, fpn_ch) for _ in range(4)]
    prior = 0.01
    p["reg_head"] = pf.conv(1, 1, fpn_ch, num_anchors * 4,
                            zero=True, bias_fill=0.0)
    p["cls_head"] = pf.conv(1, 1, fpn_ch, num_anchors * num_classes,
                            zero=True,
                            bias_fill=-math.log((1.0 - prior) / prior))
    return p


# ----------------------------------------------------------------------------
# Shared regressor / classifier head (per pyramid level, fully fused convs;
# only the final head output is sliced back to real channels).
# ----------------------------------------------------------------------------
def run_head(pyramid, tower_params, head_param, num_anchors, out_dim,
             act_head):
    head_cout = num_anchors * out_dim
    outs = []
    for f in pyramid:
        B, h, w, _ = f.shape
        for layer in tower_params:
            f = conv2d(f, layer, act="relu")
        o = conv2d(f, head_param, act=act_head, out_dtype=jnp.float32)
        outs.append(o[..., :head_cout].reshape(B, h * w * num_anchors, out_dim))
    return jnp.concatenate(outs, axis=1)


# ----------------------------------------------------------------------------
# Anchor generator (plain JAX glue — no heavy compute).
# ----------------------------------------------------------------------------
def generate_anchors(img_h, img_w, feat_shapes, anchor_scale, scales,
                     aspect_ratios):
    # TODO(synk): exact AnchorGenerator source not provided; EfficientDet-style
    # (x1,y1,x2,y2) anchors, location-major / anchor-minor ordering assumed.
    all_levels = []
    for (fh, fw) in feat_shapes:
        stride_y = img_h / fh
        stride_x = img_w / fw
        cy = (jnp.arange(fh, dtype=jnp.float32) + 0.5) * stride_y
        cx = (jnp.arange(fw, dtype=jnp.float32) + 0.5) * stride_x
        cyy, cxx = jnp.meshgrid(cy, cx, indexing="ij")
        per_anchor = []
        for s in scales:
            for ar in aspect_ratios:
                base = anchor_scale * stride_x * s
                aw = base * math.sqrt(ar)
                ah = base / math.sqrt(ar)
                per_anchor.append(jnp.stack(
                    [cxx - aw / 2, cyy - ah / 2, cxx + aw / 2, cyy + ah / 2],
                    axis=-1))
        level = jnp.stack(per_anchor, axis=2)          # (fh, fw, A, 4)
        all_levels.append(level.reshape(-1, 4))
    return jnp.concatenate(all_levels, axis=0)[None]   # (1, total, 4)


# ----------------------------------------------------------------------------
# RetinaNet forward  ==  Model.forward
# ----------------------------------------------------------------------------
def retinanet_forward(params, x_nchw, *, num_classes, num_anchors, scales,
                      aspect_ratios):
    x = jnp.transpose(x_nchw, (0, 2, 3, 1))            # NCHW -> NHWC
    B, H, W, _ = x.shape

    # backbone (strides 2..32) -> (_, _, C3, C4, C5)
    c1 = conv2d(x, params["stem"], act="relu")
    c2 = conv2d(c1, params["c2"], act="relu")
    c3 = conv2d(c2, params["c3"], act="relu")
    c4 = conv2d(c3, params["c4"], act="relu")
    c5 = conv2d(c4, params["c5"], act="relu")

    # FPN -> P3..P7 (top-down add fused into the lateral conv epilogue)
    p5 = conv2d(c5, params["lat5"])
    p4 = conv2d(c4, params["lat4"], residual=upsample2x(p5))
    p3 = conv2d(c3, params["lat3"], residual=upsample2x(p4))
    p3 = conv2d(p3, params["smooth3"])
    p4 = conv2d(p4, params["smooth4"])
    p5 = conv2d(p5, params["smooth5"])
    p6 = conv2d(c5, params["p6"])
    p7 = conv2d(jnp.maximum(p6, 0.0), params["p7"])
    pyramid = [p3, p4, p5, p6, p7]

    reg_preds = run_head(pyramid, params["reg_tower"], params["reg_head"],
                         num_anchors, 4, "none")
    cls_preds = run_head(pyramid, params["cls_tower"], params["cls_head"],
                         num_anchors, num_classes, "sigmoid")

    feat_shapes = [(f.shape[1], f.shape[2]) for f in pyramid]
    anchors = generate_anchors(H, W, feat_shapes, 4.0, scales, aspect_ratios)
    return cls_preds, reg_preds, anchors


# ----------------------------------------------------------------------------
if __name__ == "__main__":
    B, C, H, W = 2, 3, 64, 64
    num_classes = 8               # reduced from 80 to keep the example small
    fpn_ch = 32                   # reduced from 256
    scales = (2 ** 0, 2 ** (1 / 3), 2 ** (2 / 3))
    aspect_ratios = (0.5, 1.0, 2.0)
    num_anchors = len(scales) * len(aspect_ratios)

    key = jax.random.PRNGKey(0)
    kx, kt = jax.random.split(key)
    x = jax.random.normal(kx, (B, C, H, W), jnp.float32)

    # --- fused-conv kernel correctness check vs lax.conv (stride 1 and 2) ---
    pf = ParamFactory(123)
    xt = jax.random.normal(kt, (2, 8, 8, 16), jnp.float32)
    for stride in (1, 2):
        pt = pf.conv(3, 3, 16, 32, stride=stride, keep_raw=True)
        got = conv2d(xt, pt, out_dtype=jnp.float32)[..., :32]
        ref = jax.lax.conv_general_dilated(
            xt, pt["w_raw"], window_strides=(stride, stride),
            padding=((1, 1), (1, 1)),
            dimension_numbers=("NHWC", "HWIO", "NHWC"))
        err = float(jnp.max(jnp.abs(got - ref)))
        assert err < 0.1, f"stride-{stride} fused conv mismatch: {err}"

    params = init_params(num_classes=num_classes, fpn_ch=fpn_ch,
                         num_anchors=num_anchors)

    # params carry static packing metadata -> bind them in the closure so only
    # the image is a traced jit argument.
    fwd = jax.jit(functools.partial(
        retinanet_forward, params, num_classes=num_classes,
        num_anchors=num_anchors, scales=scales, aspect_ratios=aspect_ratios))

    cls_preds, reg_preds, anchors = fwd(x)
    jax.block_until_ready((cls_preds, reg_preds, anchors))

    # sanity: shapes consistent with each other
    total = reg_preds.shape[1]
    assert reg_preds.shape == (B, total, 4)
    assert cls_preds.shape == (B, total, num_classes)
    assert anchors.shape == (1, total, 4)
    # header init check: reg head zero-weight/zero-bias, cls head -> prior 0.01
    assert float(jnp.max(jnp.abs(reg_preds))) == 0.0
    assert abs(float(cls_preds[0, 0, 0]) - 0.01) < 1e-4

    print("KERNEL_OK")
</pallas_src>

<mosaic_0001>
module attributes {stable_mosaic.version = 11 : i64} {
  func.func @_conv_kernel(%arg0: i32, %arg1: i32, %arg2: memref<1x10x10x128xbf16, #tpu.memory_space<vmem>>, %arg3: memref<1152x128xbf16, #tpu.memory_space<vmem>>, %arg4: memref<1x128xf32, #tpu.memory_space<vmem>>, %arg5: memref<1x8x8x128xf32, #tpu.memory_space<vmem>>) attributes {dimension_semantics = [#tpu.dimension_semantics<parallel>, #tpu.dimension_semantics<parallel>], iteration_bounds = array<i64: 2, 1>, scalar_prefetch = 0 : i64, scratch_operands = 0 : i64, tpu.core_type = #tpu.core_type<tc>, window_params = [{transform_indices = @transform_0, window_bounds = array<i64: 1, 10, 10, 128>}, {transform_indices = @transform_1, window_bounds = array<i64: 1152, 128>}, {transform_indices = @transform_2, window_bounds = array<i64: 1, 128>}, {transform_indices = @transform_3, window_bounds = array<i64: 1, 8, 8, 128>}]} {
    %c0 = arith.constant 0 : index
    %c0_0 = arith.constant 0 : index
    %c0_1 = arith.constant 0 : index
    %c0_2 = arith.constant 0 : index
    %0 = vector.load %arg2[%c0, %c0_0, %c0_1, %c0_2] : memref<1x10x10x128xbf16, #tpu.memory_space<vmem>>, vector<1x8x8x128xbf16>
    %1 = vector.shape_cast %0 : vector<1x8x8x128xbf16> to vector<8x8x128xbf16>
    %2 = vector.shape_cast %1 : vector<8x8x128xbf16> to vector<64x128xbf16>
    %c0_3 = arith.constant 0 : index
    %c0_4 = arith.constant 0 : index
    %c1 = arith.constant 1 : index
    %c0_5 = arith.constant 0 : index
    %3 = vector.load %arg2[%c0_3, %c0_4, %c1, %c0_5] : memref<1x10x10x128xbf16, #tpu.memory_space<vmem>>, vector<1x8x8x128xbf16>
    %4 = vector.shape_cast %3 : vector<1x8x8x128xbf16> to vector<8x8x128xbf16>
    %5 = vector.shape_cast %4 : vector<8x8x128xbf16> to vector<64x128xbf16>
    %c0_6 = arith.constant 0 : index
    %c0_7 = arith.constant 0 : index
    %c2 = arith.constant 2 : index
    %c0_8 = arith.constant 0 : index
    %6 = vector.load %arg2[%c0_6, %c0_7, %c2, %c0_8] : memref<1x10x10x128xbf16, #tpu.memory_space<vmem>>, vector<1x8x8x128xbf16>
    %7 = vector.shape_cast %6 : vector<1x8x8x128xbf16> to vector<8x8x128xbf16>
    %8 = vector.shape_cast %7 : vector<8x8x128xbf16> to vector<64x128xbf16>
    %c0_9 = arith.constant 0 : index
    %c1_10 = arith.constant 1 : index
    %c0_11 = arith.constant 0 : index
    %c0_12 = arith.constant 0 : index
    %9 = vector.load %arg2[%c0_9, %c1_10, %c0_11, %c0_12] : memref<1x10x10x128xbf16, #tpu.memory_space<vmem>>, vector<1x8x8x128xbf16>
    %10 = vector.shape_cast %9 : vector<1x8x8x128xbf16> to vector<8x8x128xbf16>
    %11 = vector.shape_cast %10 : vector<8x8x128xbf16> to vector<64x128xbf16>
    %c0_13 = arith.constant 0 : index
    %c1_14 = arith.constant 1 : index
    %c1_15 = arith.constant 1 : index
    %c0_16 = arith.constant 0 : index
    %12 = vector.load %arg2[%c0_13, %c1_14, %c1_15, %c0_16] : memref<1x10x10x128xbf16, #tpu.memory_space<vmem>>, vector<1x8x8x128xbf16>
    %13 = vector.shape_cast %12 : vector<1x8x8x128xbf16> to vector<8x8x128xbf16>
    %14 = vector.shape_cast %13 : vector<8x8x128xbf16> to vector<64x128xbf16>
    %c0_17 = arith.constant 0 : index
    %c1_18 = arith.constant 1 : index
    %c2_19 = arith.constant 2 : index
    %c0_20 = arith.constant 0 : index
    %15 = vector.load %arg2[%c0_17, %c1_18, %c2_19, %c0_20] : memref<1x10x10x128xbf16, #tpu.memory_space<vmem>>, vector<1x8x8x128xbf16>
    %16 = vector.shape_cast %15 : vector<1x8x8x128xbf16> to vector<8x8x128xbf16>
    %17 = vector.shape_cast %16 : vector<8x8x128xbf16> to vector<64x128xbf16>
    %c0_21 = arith.constant 0 : index
    %c2_22 = arith.constant 2 : index
    %c0_23 = arith.constant 0 : index
    %c0_24 = arith.constant 0 : index
    %18 = vector.load %arg2[%c0_21, %c2_22, %c0_23, %c0_24] : memref<1x10x10x128xbf16, #tpu.memory_space<vmem>>, vector<1x8x8x128xbf16>
    %19 = vector.shape_cast %18 : vector<1x8x8x128xbf16> to vector<8x8x128xbf16>
    %20 = vector.shape_cast %19 : vector<8x8x128xbf16> to vector<64x128xbf16>
    %c0_25 = arith.constant 0 : index
    %c2_26 = arith.constant 2 : index
    %c1_27 = arith.constant 1 : index
    %c0_28 = arith.constant 0 : index
    %21 = vector.load %arg2[%c0_25, %c2_26, %c1_27, %c0_28] : memref<1x10x10x128xbf16, #tpu.memory_space<vmem>>, vector<1x8x8x128xbf16>
    %22 = vector.shape_cast %21 : vector<1x8x8x128xbf16> to vector<8x8x128xbf16>
    %23 = vector.shape_cast %22 : vector<8x8x128xbf16> to vector<64x128xbf16>
    %c0_29 = arith.constant 0 : index
    %c2_30 = arith.constant 2 : index
    %c2_31 = arith.constant 2 : index
    %c0_32 = arith.constant 0 : index
    %24 = vector.load %arg2[%c0_29, %c2_30, %c2_31, %c0_32] : memref<1x10x10x128xbf16, #tpu.memory_space<vmem>>, vector<1x8x8x128xbf16>
    %25 = vector.shape_cast %24 : vector<1x8x8x128xbf16> to vector<8x8x128xbf16>
    %26 = vector.shape_cast %25 : vector<8x8x128xbf16> to vector<64x128xbf16>
    %27 = tpu.concatenate %2, %5, %8, %11, %14, %17, %20, %23, %26 in 1 : vector<64x128xbf16>, vector<64x128xbf16>, vector<64x128xbf16>, vector<64x128xbf16>, vector<64x128xbf16>, vector<64x128xbf16>, vector<64x128xbf16>, vector<64x128xbf16>, vector<64x128xbf16> -> vector<64x1152xbf16>
    %c0_33 = arith.constant 0 : index
    %c0_34 = arith.constant 0 : index
    %28 = vector.load %arg3[%c0_33, %c0_34] : memref<1152x128xbf16, #tpu.memory_space<vmem>>, vector<1152x128xbf16>
    %cst = arith.constant dense<0.000000e+00> : vector<64x128xf32>
    %29 = tpu.matmul %27, %28, %cst {dimension_numbers = #tpu.dot_dimension_numbers<[1], [0], [0], [1], [0, 0, 1, 1], [], []>} : vector<64x1152xbf16>, vector<1152x128xbf16>, vector<64x128xf32> -> vector<64x128xf32>
    %c0_35 = arith.constant 0 : index
    %c0_36 = arith.constant 0 : index
    %30 = vector.load %arg4[%c0_35, %c0_36] : memref<1x128xf32, #tpu.memory_space<vmem>>, vector<1x128xf32>
    %31 = vector.broadcast %30 : vector<1x128xf32> to vector<64x128xf32>
    %32 = arith.addf %29, %31 : vector<64x128xf32>
    %33 = vector.shape_cast %32 : vector<64x128xf32> to vector<1x8x8x128xf32>
    %c0_37 = arith.constant 0 : index
    %c0_38 = arith.constant 0 : index
    %c0_39 = arith.constant 0 : index
    %c0_40 = arith.constant 0 : index
    %34 = vector.load %arg5[%c0_37, %c0_38, %c0_39, %c0_40] : memref<1x8x8x128xf32, #tpu.memory_space<vmem>>, vector<1x8x8x128xf32>
    tpu.vector_store %arg5[%c0_37, %c0_38, %c0_39, %c0_40], %33 {strides = array<i32>} : memref<1x8x8x128xf32, #tpu.memory_space<vmem>>, vector<1x8x8x128xf32>,
    return
  }
  func.func @transform_0(%arg0: i32, %arg1: i32) -> (i32, i32, i32, i32) {
    %c0_i32 = arith.constant 0 : i32
    %c0_i32_0 = arith.constant 0 : i32
    %c0_i32_1 = arith.constant 0 : i32
    %c0_i32_2 = arith.constant 0 : i32
    return %arg0, %c0_i32, %c0_i32_0, %c0_i32_1 : i32, i32, i32, i32
  }
  func.func @transform_1(%arg0: i32, %arg1: i32) -> (i32, i32) {
    %c0_i32 = arith.constant 0 : i32
    %c0_i32_0 = arith.constant 0 : i32
    return %c0_i32, %arg1 : i32, i32
  }
  func.func @transform_2(%arg0: i32, %arg1: i32) -> (i32, i32) {
    %c0_i32 = arith.constant 0 : i32
    %c0_i32_0 = arith.constant 0 : i32
    return %c0_i32, %arg1 : i32, i32
  }
  func.func @transform_3(%arg0: i32, %arg1: i32) -> (i32, i32, i32, i32) {
    %c0_i32 = arith.constant 0 : i32
    %c0_i32_0 = arith.constant 0 : i32
    %c0_i32_1 = arith.constant 0 : i32
    return %arg0, %c0_i32, %c0_i32_0, %arg1 : i32, i32, i32, i32
  }
}

</mosaic_0001>

<llo_original>
// kernel: tpu_custom_call.1
$region0: #{tpu_custom_call.1}
  #allocation0 [shape = 'u32[]', space=smem, size = 0x4, offset = 0x4, fixed_abs, tag = 'smem constant byte address 0x4 - core index']
  #allocation1 [shape = 'u32[72,128]{1,0:T(1,128)}', space=vmem, size = 0x9000, scoped, tag = 'internal scratch']
  %s0 = inlined_call_operand.vmem [shape: bf16[2,10,10,128], index: 0, kind: input, shape index: {}]
  %s1 = inlined_call_operand.hbm [shape: bf16[1152,128], index: 1, kind: input, shape index: {}]
  %s2 = inlined_call_operand.vmem [shape: f32[1,128], index: 2, kind: input, shape index: {}]
  %s3 = inlined_call_operand.hbm [shape: f32[2,8,8,128], index: 3, kind: output, shape index: {}]
  %s4 = sld [smem:[#allocation0]]
  $region49: #{tpu_custom_call.1} parent=0
    _
  %s6 = ssub.s32 1, %s4
  %s7 = scalar_select 0, %s6, %s4
  $region1: #{tpu_custom_call.1} parent=0
    #allocation2 [shape = 'u8[294912]{0}', space=vmem, size = 0x48000, scoped, tag = 'input window, operand 1, single buffered']
    #allocation3 [shape = 's32[2]{0}', space=sflag, size = 0x8, scoped, tag = 'scoped memory for tpu_custom_call.1']
    #allocation4 [shape = 's32[2]{0}', space=sflag, size = 0x8, scoped, tag = 'scoped memory for tpu_custom_call.1']
    #allocation5 [shape = 'u8[65536]{0}', space=vmem, size = 0x10000, scoped, tag = 'output window, operand 0']
    %8 = vsyncpa [#allocation3], 0
    %9 = vsyncpa [#allocation4], 0
    %s10 = scalar_lea.sflag [#allocation4], 1
    %11 = vsyncpa %s10, 0
    loop: start=0, step=1, limit=4
    $region2: #{tpu_custom_call.1} parent=1 // loop_pre_header
      _
    $region3: #{tpu_custom_call.1} parent=1 // loop_header
      %s13 = sphi 0, %s17
      %p14 = scmp.ge.s32.totalorder %s13, 4
      %s20 = sphi 0, %s32
      %s21 = sphi 0, %s28
      %s22 = sphi 0, %s20
      %s23 = sphi 0, %s21
      %s24 = sphi 0, %s22
      %s25 = sphi 0, %s23
      %s35 = sphi 0, %s37
      %s38 = sphi 0, %s35
      %s39 = sphi 0, %s38
      %s55 = sphi 0, %s39
      %s61 = sphi 0, %s63
      %s64 = sphi 0, %s61
      %s65 = sphi 0, %s64
      %s81 = sphi 0, %s65
      %s87 = sphi 0, %s89
      %s90 = sphi 0, %s87
      %s91 = sphi 0, %s90
      %s107 = sphi 0, %s91
      %s115 = sphi 0, %s117
      %s118 = sphi 0, %s115
      %s119 = sphi 0, %s118
      %s135 = sphi 0, %s119
    $region4: #{tpu_custom_call.1} parent=1 // loop_header_branch
      %16 = sbr.rel (%p14) target = $region8
    $region5: #{tpu_custom_call.1} parent=1 // loop_body
      %s18 = ssub.s32 %s13, 1
      %s19 = ssub.s32 %s13, 2
      %s26 = sadd.s32 1, %s21
      %p27 = scmp.ge.s32.totalorder %s26, 1
      %s28 = scalar_select %p27, 0, %s26
      %s29 = sadd.s32 1, %s20
      %s30 = scalar_select %p27, %s29, %s20
      %p31 = scmp.ge.s32.totalorder %s30, 2
      %s32 = scalar_select %p31, 0, %s30
      %s33 = ssub.s32 %s20, %s32
      %p34 = scmp.eq.s32.totalorder %s33, 0
      %s36 = sadd.s32 %s35, 1
      %s37 = scalar_select %p34, %s35, %s36
      %p40 = pneg %p34
      %p41 = scmp.eq.s32.totalorder %s13, 1
      %p42 = por %p40, %p41
      %p43 = scmp.ne.s32.totalorder %s35, %s38
      %p44 = scmp.eq.s32.totalorder %s13, 0
      %p45 = por %p43, %p44
      %p46 = scmp.ne.s32.totalorder %s35, %s38
      %p47 = scmp.eq.s32.totalorder %s18, 1
      %p48 = por %p46, %p47
      %p49 = scmp.ne.s32.totalorder %s38, %s39
      %p50 = scmp.eq.s32.totalorder %s18, 0
      %p51 = por %p49, %p50
      %p52 = scmp.ne.s32.totalorder %s38, %s39
      %p53 = scmp.eq.s32.totalorder %s19, 1
      %p54 = por %p52, %p53
      %p56 = scmp.ne.s32.totalorder %s39, %s55
      %p57 = scmp.eq.s32.totalorder %s19, 0
      %p58 = por %p56, %p57
      %s59 = ssub.s32 %s21, %s28
      %p60 = scmp.eq.s32.totalorder %s59, 0
      %s62 = sadd.s32 %s61, 1
      %s63 = scalar_select %p60, %s61, %s62
      %p66 = pneg %p60
      %p67 = scmp.eq.s32.totalorder %s13, 1
      %p68 = por %p66, %p67
      %p69 = scmp.ne.s32.totalorder %s61, %s64
      %p70 = scmp.eq.s32.totalorder %s13, 0
      %p71 = por %p69, %p70
      %p72 = scmp.ne.s32.totalorder %s61, %s64
      %p73 = scmp.eq.s32.totalorder %s18, 1
      %p74 = por %p72, %p73
      %p75 = scmp.ne.s32.totalorder %s64, %s65
      %p76 = scmp.eq.s32.totalorder %s18, 0
      %p77 = por %p75, %p76
      %p78 = scmp.ne.s32.totalorder %s64, %s65
      %p79 = scmp.eq.s32.totalorder %s19, 1
      %p80 = por %p78, %p79
      %p82 = scmp.ne.s32.totalorder %s65, %s81
      %p83 = scmp.eq.s32.totalorder %s19, 0
      %p84 = por %p82, %p83
      %s85 = ssub.s32 %s21, %s28
      %p86 = scmp.eq.s32.totalorder %s85, 0
      %s88 = sadd.s32 %s87, 1
      %s89 = scalar_select %p86, %s87, %s88
      %p92 = pneg %p86
      %p93 = scmp.eq.s32.totalorder %s13, 1
      %p94 = por %p92, %p93
      %p95 = scmp.ne.s32.totalorder %s87, %s90
      %p96 = scmp.eq.s32.totalorder %s13, 0
      %p97 = por %p95, %p96
      %p98 = scmp.ne.s32.totalorder %s87, %s90
      %p99 = scmp.eq.s32.totalorder %s18, 1
      %p100 = por %p98, %p99
      %p101 = scmp.ne.s32.totalorder %s90, %s91
      %p102 = scmp.eq.s32.totalorder %s18, 0
      %p103 = por %p101, %p102
      %p104 = scmp.ne.s32.totalorder %s90, %s91
      %p105 = scmp.eq.s32.totalorder %s19, 1
      %p106 = por %p104, %p105
      %p108 = scmp.ne.s32.totalorder %s91, %s107
      %p109 = scmp.eq.s32.totalorder %s19, 0
      %p110 = por %p108, %p109
      %s111 = ssub.s32 %s20, %s32
      %s112 = ssub.s32 %s21, %s28
      %s113 = sor.u32 %s111, %s112
      %p114 = scmp.eq.s32.totalorder %s113, 0
      %s116 = sadd.s32 %s115, 1
      %s117 = scalar_select %p114, %s115, %s116
      %p120 = pneg %p114
      %p121 = scmp.eq.s32.totalorder %s13, 1
      %p122 = por %p120, %p121
      %p123 = scmp.ne.s32.totalorder %s115, %s118
      %p124 = scmp.eq.s32.totalorder %s13, 0
      %p125 = por %p123, %p124
      %p126 = scmp.ne.s32.totalorder %s115, %s118
      %p127 = scmp.eq.s32.totalorder %s18, 1
      %p128 = por %p126, %p127
      %p129 = scmp.ne.s32.totalorder %s118, %s119
      %p130 = scmp.eq.s32.totalorder %s18, 0
      %p131 = por %p129, %p130
      %p132 = scmp.ne.s32.totalorder %s118, %s119
      %p133 = scmp.eq.s32.totalorder %s19, 1
      %p134 = por %p132, %p133
      %p136 = scmp.ne.s32.totalorder %s119, %s135
      %p137 = scmp.eq.s32.totalorder %s19, 0
      %p138 = por %p136, %p137
      %p139 = scmp.le.s32.totalorder 1, %s13
      %p140 = scmp.lt.s32.totalorder %s13, 3
      %p141 = pnand %p139, %p140
      %p142 = pneg %p141
      // Predicated region
      $region9: #{tpu_custom_call.1} parent=5 // pred_check
        _
      $region10: #{tpu_custom_call.1} parent=5 // pred_check_branch
        %144 = sbr.rel (%p141) target = $region12
      $region11: #{tpu_custom_call.1} parent=5 // pred_region
        %s145 = ssub.s32 %s13, 1
        // Predicated region
        $region13: #{tpu_custom_call.1} parent=11 // pred_check
          %p146 = pneg %p77
        $region14: #{tpu_custom_call.1} parent=11 // pred_check_branch
          %148 = sbr.rel (%p146) target = $region16
        $region15: #{tpu_custom_call.1} parent=11 // pred_region
          %150 = vsyncadd [#allocation3], 0
          %s151 = smul.addr %s23, 4
          %s152 = scalar_lea.hbm %s1, %s151
          %s153 = sshll.u32 %s152, 4
          %s154 = int_to_ptr.hbm [resolvable:$true] %s153
          %s155 = sshll.u32 [#allocation2], 4
          %s156 = int_to_ptr.vmem [resolvable:$true] %s155
          %161 = dma.hbm_to_vmem [thread:$0]  %s154, 9216, %s156, [#allocation3], 64, 64, 4
        $region16: #{tpu_custom_call.1} parent=11 // pred_fallthru
          _
        // Predicated region
        $region17: #{tpu_custom_call.1} parent=11 // pred_check
          %p162 = pneg %p103
        $region18: #{tpu_custom_call.1} parent=11 // pred_check_branch
          %164 = sbr.rel (%p162) target = $region20
        $region19: #{tpu_custom_call.1} parent=11 // pred_region
          %p165 = scmp.lt.s32.totalorder %s23, 0
          %s166 = scalar_select %p165, %s23, 0
          %s167 = scalar_lea.vmem %s2, %s166
        $region20: #{tpu_custom_call.1} parent=11 // pred_fallthru
          _
      $region12: #{tpu_custom_call.1} parent=5 // pred_fallthru
        _
      %p168 = scmp.lt.s32.totalorder %s13, 2
      // Predicated region
      $region21: #{tpu_custom_call.1} parent=5 // pred_check
        %p169 = pneg %p168
      $region22: #{tpu_custom_call.1} parent=5 // pred_check_branch
        %171 = sbr.rel (%p169) target = $region24
      $region23: #{tpu_custom_call.1} parent=5 // pred_region
        // Predicated region
        $region25: #{tpu_custom_call.1} parent=23 // pred_check
          %p172 = pneg %p45
        $region26: #{tpu_custom_call.1} parent=23 // pred_check_branch
          %174 = sbr.rel (%p172) target = $region28
        $region27: #{tpu_custom_call.1} parent=23 // pred_region
          %p175 = scmp.lt.s32.totalorder %s20, 1
          %s176 = scalar_select %p175, %s20, 1
          %s177 = smul.addr %s176, 20
          %s178 = smul.addr %s177, 4
          %s179 = scalar_lea.vmem %s0, %s178
        $region28: #{tpu_custom_call.1} parent=23 // pred_fallthru
          _
      $region24: #{tpu_custom_call.1} parent=5 // pred_fallthru
        _
      %p180 = scmp.le.s32.totalorder 1, %s13
      %p181 = scmp.lt.s32.totalorder %s13, 3
      %p182 = pnand %p180, %p181
      %p183 = pneg %p182
      // Predicated region
      $region29: #{tpu_custom_call.1} parent=5 // pred_check
        _
      $region30: #{tpu_custom_call.1} parent=5 // pred_check_branch
        %185 = sbr.rel (%p182) target = $region32
      $region31: #{tpu_custom_call.1} parent=5 // pred_region
        %s186 = ssub.s32 %s13, 1
        // Predicated region
        $region33: #{tpu_custom_call.1} parent=31 // pred_check
          %p187 = pneg %p77
        $region34: #{tpu_custom_call.1} parent=31 // pred_check_branch
          %189 = sbr.rel (%p187) target = $region36
        $region35: #{tpu_custom_call.1} parent=31 // pred_region
          %191 = dma.done [#allocation3], 9216
        $region36: #{tpu_custom_call.1} parent=31 // pred_fallthru
          _
        %p192 = scmp.lt.s32.totalorder %s22, 1
        %s193 = scalar_select %p192, %s22, 1
        %s194 = smul.addr %s193, 20
        %s195 = smul.addr %s194, 4
        %s196 = scalar_lea.vmem %s0, %s195
        %p197 = pneg %p51
        %p198 = pneg %p48
        %p199 = pneg %p77
        %p200 = pneg %p74
        %p201 = scmp.lt.s32.totalorder %s23, 0
        %s202 = scalar_select %p201, %s23, 0
        %s203 = scalar_lea.vmem %s2, %s202
        %p204 = pneg %p103
        %p205 = pneg %p100
        %p206 = pneg %p131
        %p207 = pneg %p128
        %s208 = sand.u32 %s118, 1
        %s209 = scalar_lea.sflag [#allocation4], %s208
        %s210 = sand.u32 %s118, 1
        %s211 = smul.addr %s210, 64
        %s212 = scalar_lea.vmem [#allocation5], %s211
        %p213 = scmp.lt.s32.totalorder %s22, 1
        %s214 = scalar_select %p213, %s22, 1
        %s215 = smul.addr %s214, 20
        %s216 = smul.addr %s215, 4
        %s217 = scalar_lea.vmem %s0, %s216
        %p218 = scmp.lt.s32.totalorder %s23, 0
        %s219 = scalar_select %p218, %s23, 0
        %s220 = scalar_lea.vmem %s2, %s219
        %v221 = vld [vmem:[%s217] sm:$0xf]
        %v222 = vld [vmem:[%s217 + $0x8] sm:$0xf]
        %v223 = vld [vmem:[%s217 + $0x10] sm:$0xf]
        %v224 = vld [vmem:[%s217 + $0x18] sm:$0xf]
        %v225 = vld [vmem:[%s217 + $0x20] sm:$0xf]
        %v226 = vld [vmem:[%s217 + $0x28] sm:$0xf]
        %v227 = vld [vmem:[%s217 + $0x30] sm:$0xf]
        %v228 = vld [vmem:[%s217 + $0x38] sm:$0xf]
        %v229 = vld [vmem:[%s217 + $0x4] sm:$0x1]
        %v230 = vld [vmem:[%s217 + $0xc] sm:$0x1]
        %v231 = vld [vmem:[%s217 + $0x14] sm:$0x1]
        %v232 = vld [vmem:[%s217 + $0x1c] sm:$0x1]
        %v233 = vld [vmem:[%s217 + $0x24] sm:$0x1]
        %v234 = vld [vmem:[%s217 + $0x2c] sm:$0x1]
        %v235 = vld [vmem:[%s217 + $0x34] sm:$0x1]
        %v236 = vld [vmem:[%s217 + $0x3c] sm:$0x1]
        %vm237 = vsmask.f32 3328
        %vm238 = vsmask.f32 7440
        %vm239 = vmor %vm237, %vm238
        %v241 = vshrl.u32 %v221, 16
        %v243 = vrot.slane %v241, 4
        %v244 = vshll.u32 %v221, 16
        %v246 = vrot.slane %v244, 5
        %v247 = vor.u32 %v243, %v246
        %v248 = vrot.slane %v247, 4
        %v250 = vshll.u32 %v229, 16
        %v252 = vrot.slane %v250, 5
        %v253 = vsel %vm239, %v248, %v252
        %v255 = vshrl.u32 %v222, 16
        %v257 = vrot.slane %v255, 4
        %v258 = vshll.u32 %v222, 16
        %v260 = vrot.slane %v258, 5
        %v261 = vor.u32 %v257, %v260
        %v262 = vrot.slane %v261, 4
        %v264 = vshll.u32 %v230, 16
        %v266 = vrot.slane %v264, 5
        %v267 = vsel %vm239, %v262, %v266
        %v269 = vshrl.u32 %v223, 16
        %v271 = vrot.slane %v269, 4
        %v272 = vshll.u32 %v223, 16
        %v274 = vrot.slane %v272, 5
        %v275 = vor.u32 %v271, %v274
        %v276 = vrot.slane %v275, 4
        %v278 = vshll.u32 %v231, 16
        %v280 = vrot.slane %v278, 5
        %v281 = vsel %vm239, %v276, %v280
        %v283 = vshrl.u32 %v224, 16
        %v285 = vrot.slane %v283, 4
        %v286 = vshll.u32 %v224, 16
        %v288 = vrot.slane %v286, 5
        %v289 = vor.u32 %v285, %v288
        %v290 = vrot.slane %v289, 4
        %v292 = vshll.u32 %v232, 16
        %v294 = vrot.slane %v292, 5
        %v295 = vsel %vm239, %v290, %v294
        %v297 = vshrl.u32 %v225, 16
        %v299 = vrot.slane %v297, 4
        %v300 = vshll.u32 %v225, 16
        %v302 = vrot.slane %v300, 5
        %v303 = vor.u32 %v299, %v302
        %v304 = vrot.slane %v303, 4
        %v306 = vshll.u32 %v233, 16
        %v308 = vrot.slane %v306, 5
        %v309 = vsel %vm239, %v304, %v308
        %v311 = vshrl.u32 %v226, 16
        %v313 = vrot.slane %v311, 4
        %v314 = vshll.u32 %v226, 16
        %v316 = vrot.slane %v314, 5
        %v317 = vor.u32 %v313, %v316
        %v318 = vrot.slane %v317, 4
        %v320 = vshll.u32 %v234, 16
        %v322 = vrot.slane %v320, 5
        %v323 = vsel %vm239, %v318, %v322
        %v325 = vshrl.u32 %v227, 16
        %v327 = vrot.slane %v325, 4
        %v328 = vshll.u32 %v227, 16
        %v330 = vrot.slane %v328, 5
        %v331 = vor.u32 %v327, %v330
        %v332 = vrot.slane %v331, 4
        %v334 = vshll.u32 %v235, 16
        %v336 = vrot.slane %v334, 5
        %v337 = vsel %vm239, %v332, %v336
        %v339 = vshrl.u32 %v228, 16
        %v341 = vrot.slane %v339, 4
        %v342 = vshll.u32 %v228, 16
        %v344 = vrot.slane %v342, 5
        %v345 = vor.u32 %v341, %v344
        %v346 = vrot.slane %v345, 4
        %v348 = vshll.u32 %v236, 16
        %v350 = vrot.slane %v348, 5
        %v351 = vsel %vm239, %v346, %v350
        %v352 = vld [vmem:[%s217] sm:$0xe]
        %v353 = vld [vmem:[%s217 + $0x8] sm:$0xe]
        %v354 = vld [vmem:[%s217 + $0x10] sm:$0xe]
        %v355 = vld [vmem:[%s217 + $0x18] sm:$0xe]
        %v356 = vld [vmem:[%s217 + $0x20] sm:$0xe]
        %v357 = vld [vmem:[%s217 + $0x28] sm:$0xe]
        %v358 = vld [vmem:[%s217 + $0x30] sm:$0xe]
        %v359 = vld [vmem:[%s217 + $0x38] sm:$0xe]
        %vm376 = vcmask 1042432
        %vm377 = vcmask 1046532
        %vm378 = vmor %vm376, %vm377
        %v379 = vrot.slane %v352, 5
        %v380 = vrot.slane %v379, 4
        %v381 = vrot.slane %v229, 5
        %v382 = vsel %vm378, %v380, %v381
        %v383 = vrot.slane %v353, 5
        %v384 = vrot.slane %v383, 4
        %v385 = vrot.slane %v230, 5
        %v386 = vsel %vm378, %v384, %v385
        %v387 = vrot.slane %v354, 5
        %v388 = vrot.slane %v387, 4
        %v389 = vrot.slane %v231, 5
        %v390 = vsel %vm378, %v388, %v389
        %v391 = vrot.slane %v355, 5
        %v392 = vrot.slane %v391, 4
        %v393 = vrot.slane %v232, 5
        %v394 = vsel %vm378, %v392, %v393
        %v395 = vrot.slane %v356, 5
        %v396 = vrot.slane %v395, 4
        %v397 = vrot.slane %v233, 5
        %v398 = vsel %vm378, %v396, %v397
        %v399 = vrot.slane %v357, 5
        %v400 = vrot.slane %v399, 4
        %v401 = vrot.slane %v234, 5
        %v402 = vsel %vm378, %v400, %v401
        %v403 = vrot.slane %v358, 5
        %v404 = vrot.slane %v403, 4
        %v405 = vrot.slane %v235, 5
        %v406 = vsel %vm378, %v404, %v405
        %v407 = vrot.slane %v359, 5
        %v408 = vrot.slane %v407, 4
        %v409 = vrot.slane %v236, 5
        %v410 = vsel %vm378, %v408, %v409
        %s411 = scalar_lea.vmem %s217, 8
        %v412 = vld [vmem:[%s411] sm:$0xf]
        %v413 = vld [vmem:[%s411 + $0x8] sm:$0xf]
        %v414 = vld [vmem:[%s411 + $0x10] sm:$0xf]
        %v415 = vld [vmem:[%s411 + $0x18] sm:$0xf]
        %v416 = vld [vmem:[%s411 + $0x20] sm:$0xf]
        %v417 = vld [vmem:[%s411 + $0x28] sm:$0xf]
        %v418 = vld [vmem:[%s411 + $0x30] sm:$0xf]
        %v419 = vld [vmem:[%s411 + $0x38] sm:$0xf]
        %v420 = vld [vmem:[%s411 + $0x4] sm:$0x1]
        %v421 = vld [vmem:[%s411 + $0xc] sm:$0x1]
        %v422 = vld [vmem:[%s411 + $0x14] sm:$0x1]
        %v423 = vld [vmem:[%s411 + $0x1c] sm:$0x1]
        %v424 = vld [vmem:[%s411 + $0x24] sm:$0x1]
        %v425 = vld [vmem:[%s411 + $0x2c] sm:$0x1]
        %v426 = vld [vmem:[%s411 + $0x34] sm:$0x1]
        %v427 = vld [vmem:[%s411 + $0x3c] sm:$0x1]
        %v429 = vshrl.u32 %v412, 16
        %v431 = vrot.slane %v429, 4
        %v432 = vshll.u32 %v412, 16
        %v434 = vrot.slane %v432, 5
        %v435 = vor.u32 %v431, %v434
        %v436 = vrot.slane %v435, 4
        %v438 = vshll.u32 %v420, 16
        %v440 = vrot.slane %v438, 5
        %v441 = vsel %vm239, %v436, %v440
        %v443 = vshrl.u32 %v413, 16
        %v445 = vrot.slane %v443, 4
        %v446 = vshll.u32 %v413, 16
        %v448 = vrot.slane %v446, 5
        %v449 = vor.u32 %v445, %v448
        %v450 = vrot.slane %v449, 4
        %v452 = vshll.u32 %v421, 16
        %v454 = vrot.slane %v452, 5
        %v455 = vsel %vm239, %v450, %v454
        %v457 = vshrl.u32 %v414, 16
        %v459 = vrot.slane %v457, 4
        %v460 = vshll.u32 %v414, 16
        %v462 = vrot.slane %v460, 5
        %v463 = vor.u32 %v459, %v462
        %v464 = vrot.slane %v463, 4
        %v466 = vshll.u32 %v422, 16
        %v468 = vrot.slane %v466, 5
        %v469 = vsel %vm239, %v464, %v468
        %v471 = vshrl.u32 %v415, 16
        %v473 = vrot.slane %v471, 4
        %v474 = vshll.u32 %v415, 16
        %v476 = vrot.slane %v474, 5
        %v477 = vor.u32 %v473, %v476
        %v478 = vrot.slane %v477, 4
        %v480 = vshll.u32 %v423, 16
        %v482 = vrot.slane %v480, 5
        %v483 = vsel %vm239, %v478, %v482
        %v485 = vshrl.u32 %v416, 16
        %v487 = vrot.slane %v485, 4
        %v488 = vshll.u32 %v416, 16
        %v490 = vrot.slane %v488, 5
        %v491 = vor.u32 %v487, %v490
        %v492 = vrot.slane %v491, 4
        %v494 = vshll.u32 %v424, 16
        %v496 = vrot.slane %v494, 5
        %v497 = vsel %vm239, %v492, %v496
        %v499 = vshrl.u32 %v417, 16
        %v501 = vrot.slane %v499, 4
        %v502 = vshll.u32 %v417, 16
        %v504 = vrot.slane %v502, 5
        %v505 = vor.u32 %v501, %v504
        %v506 = vrot.slane %v505, 4
        %v508 = vshll.u32 %v425, 16
        %v510 = vrot.slane %v508, 5
        %v511 = vsel %vm239, %v506, %v510
        %v513 = vshrl.u32 %v418, 16
        %v515 = vrot.slane %v513, 4
        %v516 = vshll.u32 %v418, 16
        %v518 = vrot.slane %v516, 5
        %v519 = vor.u32 %v515, %v518
        %v520 = vrot.slane %v519, 4
        %v522 = vshll.u32 %v426, 16
        %v524 = vrot.slane %v522, 5
        %v525 = vsel %vm239, %v520, %v524
        %v527 = vshrl.u32 %v419, 16
        %v529 = vrot.slane %v527, 4
        %v530 = vshll.u32 %v419, 16
        %v532 = vrot.slane %v530, 5
        %v533 = vor.u32 %v529, %v532
        %v534 = vrot.slane %v533, 4
        %v536 = vshll.u32 %v427, 16
        %v538 = vrot.slane %v536, 5
        %v539 = vsel %vm239, %v534, %v538
        %v540 = vld [vmem:[%s411] sm:$0xe]
        %v541 = vld [vmem:[%s411 + $0x8] sm:$0xe]
        %v542 = vld [vmem:[%s411 + $0x10] sm:$0xe]
        %v543 = vld [vmem:[%s411 + $0x18] sm:$0xe]
        %v544 = vld [vmem:[%s411 + $0x20] sm:$0xe]
        %v545 = vld [vmem:[%s411 + $0x28] sm:$0xe]
        %v546 = vld [vmem:[%s411 + $0x30] sm:$0xe]
        %v547 = vld [vmem:[%s411 + $0x38] sm:$0xe]
        %v564 = vrot.slane %v540, 5
        %v565 = vrot.slane %v564, 4
        %v566 = vrot.slane %v420, 5
        %v567 = vsel %vm378, %v565, %v566
        %v568 = vrot.slane %v541, 5
        %v569 = vrot.slane %v568, 4
        %v570 = vrot.slane %v421, 5
        %v571 = vsel %vm378, %v569, %v570
        %v572 = vrot.slane %v542, 5
        %v573 = vrot.slane %v572, 4
        %v574 = vrot.slane %v422, 5
        %v575 = vsel %vm378, %v573, %v574
        %v576 = vrot.slane %v543, 5
        %v577 = vrot.slane %v576, 4
        %v578 = vrot.slane %v423, 5
        %v579 = vsel %vm378, %v577, %v578
        %v580 = vrot.slane %v544, 5
        %v581 = vrot.slane %v580, 4
        %v582 = vrot.slane %v424, 5
        %v583 = vsel %vm378, %v581, %v582
        %v584 = vrot.slane %v545, 5
        %v585 = vrot.slane %v584, 4
        %v586 = vrot.slane %v425, 5
        %v587 = vsel %vm378, %v585, %v586
        %v588 = vrot.slane %v546, 5
        %v589 = vrot.slane %v588, 4
        %v590 = vrot.slane %v426, 5
        %v591 = vsel %vm378, %v589, %v590
        %v592 = vrot.slane %v547, 5
        %v593 = vrot.slane %v592, 4
        %v594 = vrot.slane %v427, 5
        %v595 = vsel %vm378, %v593, %v594
        %s596 = scalar_lea.vmem %s217, 16
        %v597 = vld [vmem:[%s596] sm:$0xf]
        %v598 = vld [vmem:[%s596 + $0x8] sm:$0xf]
        %v599 = vld [vmem:[%s596 + $0x10] sm:$0xf]
        %v600 = vld [vmem:[%s596 + $0x18] sm:$0xf]
        %v601 = vld [vmem:[%s596 + $0x20] sm:$0xf]
        %v602 = vld [vmem:[%s596 + $0x28] sm:$0xf]
        %v603 = vld [vmem:[%s596 + $0x30] sm:$0xf]
        %v604 = vld [vmem:[%s596 + $0x38] sm:$0xf]
        %v605 = vld [vmem:[%s596 + $0x4] sm:$0x1]
        %v606 = vld [vmem:[%s596 + $0xc] sm:$0x1]
        %v607 = vld [vmem:[%s596 + $0x14] sm:$0x1]
        %v608 = vld [vmem:[%s596 + $0x1c] sm:$0x1]
        %v609 = vld [vmem:[%s596 + $0x24] sm:$0x1]
        %v610 = vld [vmem:[%s596 + $0x2c] sm:$0x1]
        %v611 = vld [vmem:[%s596 + $0x34] sm:$0x1]
        %v612 = vld [vmem:[%s596 + $0x3c] sm:$0x1]
        %v614 = vshrl.u32 %v597, 16
        %v616 = vrot.slane %v614, 4
        %v617 = vshll.u32 %v597, 16
        %v619 = vrot.slane %v617, 5
        %v620 = vor.u32 %v616, %v619
        %v621 = vrot.slane %v620, 4
        %v623 = vshll.u32 %v605, 16
        %v625 = vrot.slane %v623, 5
        %v626 = vsel %vm239, %v621, %v625
        %v628 = vshrl.u32 %v598, 16
        %v630 = vrot.slane %v628, 4
        %v631 = vshll.u32 %v598, 16
        %v633 = vrot.slane %v631, 5
        %v634 = vor.u32 %v630, %v633
        %v635 = vrot.slane %v634, 4
        %v637 = vshll.u32 %v606, 16
        %v639 = vrot.slane %v637, 5
        %v640 = vsel %vm239, %v635, %v639
        %v642 = vshrl.u32 %v599, 16
        %v644 = vrot.slane %v642, 4
        %v645 = vshll.u32 %v599, 16
        %v647 = vrot.slane %v645, 5
        %v648 = vor.u32 %v644, %v647
        %v649 = vrot.slane %v648, 4
        %v651 = vshll.u32 %v607, 16
        %v653 = vrot.slane %v651, 5
        %v654 = vsel %vm239, %v649, %v653
        %v656 = vshrl.u32 %v600, 16
        %v658 = vrot.slane %v656, 4
        %v659 = vshll.u32 %v600, 16
        %v661 = vrot.slane %v659, 5
        %v662 = vor.u32 %v658, %v661
        %v663 = vrot.slane %v662, 4
        %v665 = vshll.u32 %v608, 16
        %v667 = vrot.slane %v665, 5
        %v668 = vsel %vm239, %v663, %v667
        %v670 = vshrl.u32 %v601, 16
        %v672 = vrot.slane %v670, 4
        %v673 = vshll.u32 %v601, 16
        %v675 = vrot.slane %v673, 5
        %v676 = vor.u32 %v672, %v675
        %v677 = vrot.slane %v676, 4
        %v679 = vshll.u32 %v609, 16
        %v681 = vrot.slane %v679, 5
        %v682 = vsel %vm239, %v677, %v681
        %v684 = vshrl.u32 %v602, 16
        %v686 = vrot.slane %v684, 4
        %v687 = vshll.u32 %v602, 16
        %v689 = vrot.slane %v687, 5
        %v690 = vor.u32 %v686, %v689
        %v691 = vrot.slane %v690, 4
        %v693 = vshll.u32 %v610, 16
        %v695 = vrot.slane %v693, 5
        %v696 = vsel %vm239, %v691, %v695
        %v698 = vshrl.u32 %v603, 16
        %v700 = vrot.slane %v698, 4
        %v701 = vshll.u32 %v603, 16
        %v703 = vrot.slane %v701, 5
        %v704 = vor.u32 %v700, %v703
        %v705 = vrot.slane %v704, 4
        %v707 = vshll.u32 %v611, 16
        %v709 = vrot.slane %v707, 5
        %v710 = vsel %vm239, %v705, %v709
        %v712 = vshrl.u32 %v604, 16
        %v714 = vrot.slane %v712, 4
        %v715 = vshll.u32 %v604, 16
        %v717 = vrot.slane %v715, 5
        %v718 = vor.u32 %v714, %v717
        %v719 = vrot.slane %v718, 4
        %v721 = vshll.u32 %v612, 16
        %v723 = vrot.slane %v721, 5
        %v724 = vsel %vm239, %v719, %v723
        %v725 = vld [vmem:[%s596] sm:$0xe]
        %v726 = vld [vmem:[%s596 + $0x8] sm:$0xe]
        %v727 = vld [vmem:[%s596 + $0x10] sm:$0xe]
        %v728 = vld [vmem:[%s596 + $0x18] sm:$0xe]
        %v729 = vld [vmem:[%s596 + $0x20] sm:$0xe]
        %v730 = vld [vmem:[%s596 + $0x28] sm:$0xe]
        %v731 = vld [vmem:[%s596 + $0x30] sm:$0xe]
        %v732 = vld [vmem:[%s596 + $0x38] sm:$0xe]
        %v749 = vrot.slane %v725, 5
        %v750 = vrot.slane %v749, 4
        %v751 = vrot.slane %v605, 5
        %v752 = vsel %vm378, %v750, %v751
        %v753 = vrot.slane %v726, 5
        %v754 = vrot.slane %v753, 4
        %v755 = vrot.slane %v606, 5
        %v756 = vsel %vm378, %v754, %v755
        %v757 = vrot.slane %v727, 5
        %v758 = vrot.slane %v757, 4
        %v759 = vrot.slane %v607, 5
        %v760 = vsel %vm378, %v758, %v759
        %v761 = vrot.slane %v728, 5
        %v762 = vrot.slane %v761, 4
        %v763 = vrot.slane %v608, 5
        %v764 = vsel %vm378, %v762, %v763
        %v765 = vrot.slane %v729, 5
        %v766 = vrot.slane %v765, 4
        %v767 = vrot.slane %v609, 5
        %v768 = vsel %vm378, %v766, %v767
        %v769 = vrot.slane %v730, 5
        %v770 = vrot.slane %v769, 4
        %v771 = vrot.slane %v610, 5
        %v772 = vsel %vm378, %v770, %v771
        %v773 = vrot.slane %v731, 5
        %v774 = vrot.slane %v773, 4
        %v775 = vrot.slane %v611, 5
        %v776 = vsel %vm378, %v774, %v775
        %v777 = vrot.slane %v732, 5
        %v778 = vrot.slane %v777, 4
        %v779 = vrot.slane %v612, 5
        %v780 = vsel %vm378, %v778, %v779
        %v789 = vunpack.c.l.b16 %v221
        %v790 = vunpack.c.l.b16 %v222
        %v791 = vunpack.c.l.b16 %v223
        %v792 = vunpack.c.l.b16 %v224
        %v793 = vunpack.c.l.b16 %v225
        %v794 = vunpack.c.l.b16 %v226
        %v795 = vunpack.c.l.b16 %v227
        %v796 = vunpack.c.l.b16 %v228
        %v797 = vpack.c.b16 %v790, %v789
        %v798 = vpack.c.b16 %v792, %v791
        %v799 = vpack.c.b16 %v794, %v793
        %v800 = vpack.c.b16 %v796, %v795
        %v805 = vunpack.c.l.b16 %v253
        %v806 = vunpack.c.l.b16 %v267
        %v807 = vunpack.c.l.b16 %v281
        %v808 = vunpack.c.l.b16 %v295
        %v809 = vunpack.c.l.b16 %v309
        %v810 = vunpack.c.l.b16 %v323
        %v811 = vunpack.c.l.b16 %v337
        %v812 = vunpack.c.l.b16 %v351
        %v813 = vpack.c.b16 %v806, %v805
        %v814 = vpack.c.b16 %v808, %v807
        %v815 = vpack.c.b16 %v810, %v809
        %v816 = vpack.c.b16 %v812, %v811
        %v821 = vunpack.c.l.b16 %v382
        %v822 = vunpack.c.l.b16 %v386
        %v823 = vunpack.c.l.b16 %v390
        %v824 = vunpack.c.l.b16 %v394
        %v825 = vunpack.c.l.b16 %v398
        %v826 = vunpack.c.l.b16 %v402
        %v827 = vunpack.c.l.b16 %v406
        %v828 = vunpack.c.l.b16 %v410
        %v829 = vpack.c.b16 %v822, %v821
        %v830 = vpack.c.b16 %v824, %v823
        %v831 = vpack.c.b16 %v826, %v825
        %v832 = vpack.c.b16 %v828, %v827
        %v845 = vunpack.c.l.b16 %v412
        %v846 = vunpack.c.l.b16 %v413
        %v847 = vunpack.c.l.b16 %v414
        %v848 = vunpack.c.l.b16 %v415
        %v849 = vunpack.c.l.b16 %v416
        %v850 = vunpack.c.l.b16 %v417
        %v851 = vunpack.c.l.b16 %v418
        %v852 = vunpack.c.l.b16 %v419
        %v853 = vpack.c.b16 %v846, %v845
        %v854 = vpack.c.b16 %v848, %v847
        %v855 = vpack.c.b16 %v850, %v849
        %v856 = vpack.c.b16 %v852, %v851
        %v861 = vunpack.c.l.b16 %v441
        %v862 = vunpack.c.l.b16 %v455
        %v863 = vunpack.c.l.b16 %v469
        %v864 = vunpack.c.l.b16 %v483
        %v865 = vunpack.c.l.b16 %v497
        %v866 = vunpack.c.l.b16 %v511
        %v867 = vunpack.c.l.b16 %v525
        %v868 = vunpack.c.l.b16 %v539
        %v869 = vpack.c.b16 %v862, %v861
        %v870 = vpack.c.b16 %v864, %v863
        %v871 = vpack.c.b16 %v866, %v865
        %v872 = vpack.c.b16 %v868, %v867
        %v877 = vunpack.c.l.b16 %v567
        %v878 = vunpack.c.l.b16 %v571
        %v879 = vunpack.c.l.b16 %v575
        %v880 = vunpack.c.l.b16 %v579
        %v881 = vunpack.c.l.b16 %v583
        %v882 = vunpack.c.l.b16 %v587
        %v883 = vunpack.c.l.b16 %v591
        %v884 = vunpack.c.l.b16 %v595
        %v885 = vpack.c.b16 %v878, %v877
        %v886 = vpack.c.b16 %v880, %v879
        %v887 = vpack.c.b16 %v882, %v881
        %v888 = vpack.c.b16 %v884, %v883
        %v901 = vunpack.c.l.b16 %v597
        %v902 = vunpack.c.l.b16 %v598
        %v903 = vunpack.c.l.b16 %v599
        %v904 = vunpack.c.l.b16 %v600
        %v905 = vunpack.c.l.b16 %v601
        %v906 = vunpack.c.l.b16 %v602
        %v907 = vunpack.c.l.b16 %v603
        %v908 = vunpack.c.l.b16 %v604
        %v909 = vpack.c.b16 %v902, %v901
        %v910 = vpack.c.b16 %v904, %v903
        %v911 = vpack.c.b16 %v906, %v905
        %v912 = vpack.c.b16 %v908, %v907
        %v917 = vunpack.c.l.b16 %v626
        %v918 = vunpack.c.l.b16 %v640
        %v919 = vunpack.c.l.b16 %v654
        %v920 = vunpack.c.l.b16 %v668
        %v921 = vunpack.c.l.b16 %v682
        %v922 = vunpack.c.l.b16 %v696
        %v923 = vunpack.c.l.b16 %v710
        %v924 = vunpack.c.l.b16 %v724
        %v925 = vpack.c.b16 %v918, %v917
        %v926 = vpack.c.b16 %v920, %v919
        %v927 = vpack.c.b16 %v922, %v921
        %v928 = vpack.c.b16 %v924, %v923
        %v933 = vunpack.c.l.b16 %v752
        %v934 = vunpack.c.l.b16 %v756
        %v935 = vunpack.c.l.b16 %v760
        %v936 = vunpack.c.l.b16 %v764
        %v937 = vunpack.c.l.b16 %v768
        %v938 = vunpack.c.l.b16 %v772
        %v939 = vunpack.c.l.b16 %v776
        %v940 = vunpack.c.l.b16 %v780
        %v941 = vpack.c.b16 %v934, %v933
        %v942 = vpack.c.b16 %v936, %v935
        %v943 = vpack.c.b16 %v938, %v937
        %v944 = vpack.c.b16 %v940, %v939
        %v949 = vld [vmem:[#allocation2] sm:$0xf]
        %v950 = vld [vmem:[#allocation2 + $0x4] sm:$0xf]
        %v951 = vld [vmem:[#allocation2 + $0x8] sm:$0xf]
        %v952 = vld [vmem:[#allocation2 + $0xc] sm:$0xf]
        %v953 = vld [vmem:[#allocation2 + $0x10] sm:$0xf]
        %v954 = vld [vmem:[#allocation2 + $0x14] sm:$0xf]
        %v955 = vld [vmem:[#allocation2 + $0x18] sm:$0xf]
        %v956 = vld [vmem:[#allocation2 + $0x1c] sm:$0xf]
        %v957 = vld [vmem:[#allocation2 + $0x20] sm:$0xf]
        %v958 = vld [vmem:[#allocation2 + $0x24] sm:$0xf]
        %v959 = vld [vmem:[#allocation2 + $0x28] sm:$0xf]
        %v960 = vld [vmem:[#allocation2 + $0x2c] sm:$0xf]
        %v961 = vld [vmem:[#allocation2 + $0x30] sm:$0xf]
        %v962 = vld [vmem:[#allocation2 + $0x34] sm:$0xf]
        %v963 = vld [vmem:[#allocation2 + $0x38] sm:$0xf]
        %v964 = vld [vmem:[#allocation2 + $0x3c] sm:$0xf]
        %v965 = vld [vmem:[#allocation2 + $0x40] sm:$0xf]
        %v966 = vld [vmem:[#allocation2 + $0x44] sm:$0xf]
        %v967 = vld [vmem:[#allocation2 + $0x48] sm:$0xf]
        %v968 = vld [vmem:[#allocation2 + $0x4c] sm:$0xf]
        %v969 = vld [vmem:[#allocation2 + $0x50] sm:$0xf]
        %v970 = vld [vmem:[#allocation2 + $0x54] sm:$0xf]
        %v971 = vld [vmem:[#allocation2 + $0x58] sm:$0xf]
        %v972 = vld [vmem:[#allocation2 + $0x5c] sm:$0xf]
        %v973 = vld [vmem:[#allocation2 + $0x60] sm:$0xf]
        %v974 = vld [vmem:[#allocation2 + $0x64] sm:$0xf]
        %v975 = vld [vmem:[#allocation2 + $0x68] sm:$0xf]
        %v976 = vld [vmem:[#allocation2 + $0x6c] sm:$0xf]
        %v977 = vld [vmem:[#allocation2 + $0x70] sm:$0xf]
        %v978 = vld [vmem:[#allocation2 + $0x74] sm:$0xf]
        %v979 = vld [vmem:[#allocation2 + $0x78] sm:$0xf]
        %v980 = vld [vmem:[#allocation2 + $0x7c] sm:$0xf]
        %v981 = vld [vmem:[#allocation2 + $0x80] sm:$0xf]
        %v982 = vld [vmem:[#allocation2 + $0x84] sm:$0xf]
        %v983 = vld [vmem:[#allocation2 + $0x88] sm:$0xf]
        %v984 = vld [vmem:[#allocation2 + $0x8c] sm:$0xf]
        %v985 = vld [vmem:[#allocation2 + $0x90] sm:$0xf]
        %v986 = vld [vmem:[#allocation2 + $0x94] sm:$0xf]
        %v987 = vld [vmem:[#allocation2 + $0x98] sm:$0xf]
        %v988 = vld [vmem:[#allocation2 + $0x9c] sm:$0xf]
        %v989 = vld [vmem:[#allocation2 + $0xa0] sm:$0xf]
        %v990 = vld [vmem:[#allocation2 + $0xa4] sm:$0xf]
        %v991 = vld [vmem:[#allocation2 + $0xa8] sm:$0xf]
        %v992 = vld [vmem:[#allocation2 + $0xac] sm:$0xf]
        %v993 = vld [vmem:[#allocation2 + $0xb0] sm:$0xf]
        %v994 = vld [vmem:[#allocation2 + $0xb4] sm:$0xf]
        %v995 = vld [vmem:[#allocation2 + $0xb8] sm:$0xf]
        %v996 = vld [vmem:[#allocation2 + $0xbc] sm:$0xf]
        %v997 = vld [vmem:[#allocation2 + $0xc0] sm:$0xf]
        %v998 = vld [vmem:[#allocation2 + $0xc4] sm:$0xf]
        %v999 = vld [vmem:[#allocation2 + $0xc8] sm:$0xf]
        %v1000 = vld [vmem:[#allocation2 + $0xcc] sm:$0xf]
        %v1001 = vld [vmem:[#allocation2 + $0xd0] sm:$0xf]
        %v1002 = vld [vmem:[#allocation2 + $0xd4] sm:$0xf]
        %v1003 = vld [vmem:[#allocation2 + $0xd8] sm:$0xf]
        %v1004 = vld [vmem:[#allocation2 + $0xdc] sm:$0xf]
        %v1005 = vld [vmem:[#allocation2 + $0xe0] sm:$0xf]
        %v1006 = vld [vmem:[#allocation2 + $0xe4] sm:$0xf]
        %v1007 = vld [vmem:[#allocation2 + $0xe8] sm:$0xf]
        %v1008 = vld [vmem:[#allocation2 + $0xec] sm:$0xf]
        %v1009 = vld [vmem:[#allocation2 + $0xf0] sm:$0xf]
        %v1010 = vld [vmem:[#allocation2 + $0xf4] sm:$0xf]
        %v1011 = vld [vmem:[#allocation2 + $0xf8] sm:$0xf]
        %v1012 = vld [vmem:[#allocation2 + $0xfc] sm:$0xf]
        %v1013 = vld [vmem:[#allocation2 + $0x100] sm:$0xf]
        %v1014 = vld [vmem:[#allocation2 + $0x104] sm:$0xf]
        %v1015 = vld [vmem:[#allocation2 + $0x108] sm:$0xf]
        %v1016 = vld [vmem:[#allocation2 + $0x10c] sm:$0xf]
        %v1017 = vld [vmem:[#allocation2 + $0x110] sm:$0xf]
        %v1018 = vld [vmem:[#allocation2 + $0x114] sm:$0xf]
        %v1019 = vld [vmem:[#allocation2 + $0x118] sm:$0xf]
        %v1020 = vld [vmem:[#allocation2 + $0x11c] sm:$0xf]
        %v1021 = vld [vmem:[#allocation2 + $0x120] sm:$0xf]
        %v1022 = vld [vmem:[#allocation2 + $0x124] sm:$0xf]
        %v1023 = vld [vmem:[#allocation2 + $0x128] sm:$0xf]
        %v1024 = vld [vmem:[#allocation2 + $0x12c] sm:$0xf]
        %v1025 = vld [vmem:[#allocation2 + $0x130] sm:$0xf]
        %v1026 = vld [vmem:[#allocation2 + $0x134] sm:$0xf]
        %v1027 = vld [vmem:[#allocation2 + $0x138] sm:$0xf]
        %v1028 = vld [vmem:[#allocation2 + $0x13c] sm:$0xf]
        %v1029 = vld [vmem:[#allocation2 + $0x140] sm:$0xf]
        %v1030 = vld [vmem:[#allocation2 + $0x144] sm:$0xf]
        %v1031 = vld [vmem:[#allocation2 + $0x148] sm:$0xf]
        %v1032 = vld [vmem:[#allocation2 + $0x14c] sm:$0xf]
        %v1033 = vld [vmem:[#allocation2 + $0x150] sm:$0xf]
        %v1034 = vld [vmem:[#allocation2 + $0x154] sm:$0xf]
        %v1035 = vld [vmem:[#allocation2 + $0x158] sm:$0xf]
        %v1036 = vld [vmem:[#allocation2 + $0x15c] sm:$0xf]
        %v1037 = vld [vmem:[#allocation2 + $0x160] sm:$0xf]
        %v1038 = vld [vmem:[#allocation2 + $0x164] sm:$0xf]
        %v1039 = vld [vmem:[#allocation2 + $0x168] sm:$0xf]
        %v1040 = vld [vmem:[#allocation2 + $0x16c] sm:$0xf]
        %v1041 = vld [vmem:[#allocation2 + $0x170] sm:$0xf]
        %v1042 = vld [vmem:[#allocation2 + $0x174] sm:$0xf]
        %v1043 = vld [vmem:[#allocation2 + $0x178] sm:$0xf]
        %v1044 = vld [vmem:[#allocation2 + $0x17c] sm:$0xf]
        %v1045 = vld [vmem:[#allocation2 + $0x180] sm:$0xf]
        %v1046 = vld [vmem:[#allocation2 + $0x184] sm:$0xf]
        %v1047 = vld [vmem:[#allocation2 + $0x188] sm:$0xf]
        %v1048 = vld [vmem:[#allocation2 + $0x18c] sm:$0xf]
        %v1049 = vld [vmem:[#allocation2 + $0x190] sm:$0xf]
        %v1050 = vld [vmem:[#allocation2 + $0x194] sm:$0xf]
        %v1051 = vld [vmem:[#allocation2 + $0x198] sm:$0xf]
        %v1052 = vld [vmem:[#allocation2 + $0x19c] sm:$0xf]
        %v1053 = vld [vmem:[#allocation2 + $0x1a0] sm:$0xf]
        %v1054 = vld [vmem:[#allocation2 + $0x1a4] sm:$0xf]
        %v1055 = vld [vmem:[#allocation2 + $0x1a8] sm:$0xf]
        %v1056 = vld [vmem:[#allocation2 + $0x1ac] sm:$0xf]
        %v1057 = vld [vmem:[#allocation2 + $0x1b0] sm:$0xf]
        %v1058 = vld [vmem:[#allocation2 + $0x1b4] sm:$0xf]
        %v1059 = vld [vmem:[#allocation2 + $0x1b8] sm:$0xf]
        %v1060 = vld [vmem:[#allocation2 + $0x1bc] sm:$0xf]
        %v1061 = vld [vmem:[#allocation2 + $0x1c0] sm:$0xf]
        %v1062 = vld [vmem:[#allocation2 + $0x1c4] sm:$0xf]
        %v1063 = vld [vmem:[#allocation2 + $0x1c8] sm:$0xf]
        %v1064 = vld [vmem:[#allocation2 + $0x1cc] sm:$0xf]
        %v1065 = vld [vmem:[#allocation2 + $0x1d0] sm:$0xf]
        %v1066 = vld [vmem:[#allocation2 + $0x1d4] sm:$0xf]
        %v1067 = vld [vmem:[#allocation2 + $0x1d8] sm:$0xf]
        %v1068 = vld [vmem:[#allocation2 + $0x1dc] sm:$0xf]
        %v1069 = vld [vmem:[#allocation2 + $0x1e0] sm:$0xf]
        %v1070 = vld [vmem:[#allocation2 + $0x1e4] sm:$0xf]
        %v1071 = vld [vmem:[#allocation2 + $0x1e8] sm:$0xf]
        %v1072 = vld [vmem:[#allocation2 + $0x1ec] sm:$0xf]
        %v1073 = vld [vmem:[#allocation2 + $0x1f0] sm:$0xf]
        %v1074 = vld [vmem:[#allocation2 + $0x1f4] sm:$0xf]
        %v1075 = vld [vmem:[#allocation2 + $0x1f8] sm:$0xf]
        %v1076 = vld [vmem:[#allocation2 + $0x1fc] sm:$0xf]
        %v1077 = vld [vmem:[#allocation2 + $0x200] sm:$0xf]
        %v1078 = vld [vmem:[#allocation2 + $0x204] sm:$0xf]
        %v1079 = vld [vmem:[#allocation2 + $0x208] sm:$0xf]
        %v1080 = vld [vmem:[#allocation2 + $0x20c] sm:$0xf]
        %v1081 = vld [vmem:[#allocation2 + $0x210] sm:$0xf]
        %v1082 = vld [vmem:[#allocation2 + $0x214] sm:$0xf]
        %v1083 = vld [vmem:[#allocation2 + $0x218] sm:$0xf]
        %v1084 = vld [vmem:[#allocation2 + $0x21c] sm:$0xf]
        %v1085 = vld [vmem:[#allocation2 + $0x220] sm:$0xf]
        %v1086 = vld [vmem:[#allocation2 + $0x224] sm:$0xf]
        %v1087 = vld [vmem:[#allocation2 + $0x228] sm:$0xf]
        %v1088 = vld [vmem:[#allocation2 + $0x22c] sm:$0xf]
        %v1089 = vld [vmem:[#allocation2 + $0x230] sm:$0xf]
        %v1090 = vld [vmem:[#allocation2 + $0x234] sm:$0xf]
        %v1091 = vld [vmem:[#allocation2 + $0x238] sm:$0xf]
        %v1092 = vld [vmem:[#allocation2 + $0x23c] sm:$0xf]
        %v1093 = vld [vmem:[%s220] sm:$0x1]
        %v1095 = vperm.slane %v1093, 0
        %v1241 = vunpack.c.l.b16 %v949
        %v1242 = vunpack.c.l.b16 %v950
        %v1243 = vunpack.c.l.b16 %v951
        %v1244 = vunpack.c.l.b16 %v952
        %v1245 = vunpack.c.l.b16 %v953
        %v1246 = vunpack.c.l.b16 %v954
        %v1247 = vunpack.c.l.b16 %v955
        %v1248 = vunpack.c.l.b16 %v956
        %v1249 = vunpack.c.l.b16 %v957
        %v1250 = vunpack.c.l.b16 %v958
        %v1251 = vunpack.c.l.b16 %v959
        %v1252 = vunpack.c.l.b16 %v960
        %v1253 = vunpack.c.l.b16 %v961
        %v1254 = vunpack.c.l.b16 %v962
        %v1255 = vunpack.c.l.b16 %v963
        %v1256 = vunpack.c.l.b16 %v964
        %v1257 = vunpack.c.l.b16 %v965
        %v1258 = vunpack.c.l.b16 %v966
        %v1259 = vunpack.c.l.b16 %v967
        %v1260 = vunpack.c.l.b16 %v968
        %v1261 = vunpack.c.l.b16 %v969
        %v1262 = vunpack.c.l.b16 %v970
        %v1263 = vunpack.c.l.b16 %v971
        %v1264 = vunpack.c.l.b16 %v972
        %v1265 = vunpack.c.l.b16 %v973
        %v1266 = vunpack.c.l.b16 %v974
        %v1267 = vunpack.c.l.b16 %v975
        %v1268 = vunpack.c.l.b16 %v976
        %v1269 = vunpack.c.l.b16 %v977
        %v1270 = vunpack.c.l.b16 %v978
        %v1271 = vunpack.c.l.b16 %v979
        %v1272 = vunpack.c.l.b16 %v980
        %v1273 = vunpack.c.l.b16 %v981
        %v1274 = vunpack.c.l.b16 %v982
        %v1275 = vunpack.c.l.b16 %v983
        %v1276 = vunpack.c.l.b16 %v984
        %v1277 = vunpack.c.l.b16 %v985
        %v1278 = vunpack.c.l.b16 %v986
        %v1279 = vunpack.c.l.b16 %v987
        %v1280 = vunpack.c.l.b16 %v988
        %v1281 = vunpack.c.l.b16 %v989
        %v1282 = vunpack.c.l.b16 %v990
        %v1283 = vunpack.c.l.b16 %v991
        %v1284 = vunpack.c.l.b16 %v992
        %v1285 = vunpack.c.l.b16 %v993
        %v1286 = vunpack.c.l.b16 %v994
        %v1287 = vunpack.c.l.b16 %v995
        %v1288 = vunpack.c.l.b16 %v996
        %v1289 = vunpack.c.l.b16 %v997
        %v1290 = vunpack.c.l.b16 %v998
        %v1291 = vunpack.c.l.b16 %v999
        %v1292 = vunpack.c.l.b16 %v1000
        %v1293 = vunpack.c.l.b16 %v1001
        %v1294 = vunpack.c.l.b16 %v1002
        %v1295 = vunpack.c.l.b16 %v1003
        %v1296 = vunpack.c.l.b16 %v1004
        %v1297 = vunpack.c.l.b16 %v1005
        %v1298 = vunpack.c.l.b16 %v1006
        %v1299 = vunpack.c.l.b16 %v1007
        %v1300 = vunpack.c.l.b16 %v1008
        %v1301 = vunpack.c.l.b16 %v1009
        %v1302 = vunpack.c.l.b16 %v1010
        %v1303 = vunpack.c.l.b16 %v1011
        %v1304 = vunpack.c.l.b16 %v1012
        %v1305 = vunpack.c.l.b16 %v1013
        %v1306 = vunpack.c.l.b16 %v1014
        %v1307 = vunpack.c.l.b16 %v1015
        %v1308 = vunpack.c.l.b16 %v1016
        %v1309 = vunpack.c.l.b16 %v1017
        %v1310 = vunpack.c.l.b16 %v1018
        %v1311 = vunpack.c.l.b16 %v1019
        %v1312 = vunpack.c.l.b16 %v1020
        %v1313 = vunpack.c.l.b16 %v1021
        %v1314 = vunpack.c.l.b16 %v1022
        %v1315 = vunpack.c.l.b16 %v1023
        %v1316 = vunpack.c.l.b16 %v1024
        %v1317 = vunpack.c.l.b16 %v1025
        %v1318 = vunpack.c.l.b16 %v1026
        %v1319 = vunpack.c.l.b16 %v1027
        %v1320 = vunpack.c.l.b16 %v1028
        %v1321 = vunpack.c.l.b16 %v1029
        %v1322 = vunpack.c.l.b16 %v1030
        %v1323 = vunpack.c.l.b16 %v1031
        %v1324 = vunpack.c.l.b16 %v1032
        %v1325 = vunpack.c.l.b16 %v1033
        %v1326 = vunpack.c.l.b16 %v1034
        %v1327 = vunpack.c.l.b16 %v1035
        %v1328 = vunpack.c.l.b16 %v1036
        %v1329 = vunpack.c.l.b16 %v1037
        %v1330 = vunpack.c.l.b16 %v1038
        %v1331 = vunpack.c.l.b16 %v1039
        %v1332 = vunpack.c.l.b16 %v1040
        %v1333 = vunpack.c.l.b16 %v1041
        %v1334 = vunpack.c.l.b16 %v1042
        %v1335 = vunpack.c.l.b16 %v1043
        %v1336 = vunpack.c.l.b16 %v1044
        %v1337 = vunpack.c.l.b16 %v1045
        %v1338 = vunpack.c.l.b16 %v1046
        %v1339 = vunpack.c.l.b16 %v1047
        %v1340 = vunpack.c.l.b16 %v1048
        %v1341 = vunpack.c.l.b16 %v1049
        %v1342 = vunpack.c.l.b16 %v1050
        %v1343 = vunpack.c.l.b16 %v1051
        %v1344 = vunpack.c.l.b16 %v1052
        %v1345 = vunpack.c.l.b16 %v1053
        %v1346 = vunpack.c.l.b16 %v1054
        %v1347 = vunpack.c.l.b16 %v1055
        %v1348 = vunpack.c.l.b16 %v1056
        %v1349 = vunpack.c.l.b16 %v1057
        %v1350 = vunpack.c.l.b16 %v1058
        %v1351 = vunpack.c.l.b16 %v1059
        %v1352 = vunpack.c.l.b16 %v1060
        %v1353 = vunpack.c.l.b16 %v1061
        %v1354 = vunpack.c.l.b16 %v1062
        %v1355 = vunpack.c.l.b16 %v1063
        %v1356 = vunpack.c.l.b16 %v1064
        %v1357 = vunpack.c.l.b16 %v1065
        %v1358 = vunpack.c.l.b16 %v1066
        %v1359 = vunpack.c.l.b16 %v1067
        %v1360 = vunpack.c.l.b16 %v1068
        %v1361 = vunpack.c.l.b16 %v1069
        %v1362 = vunpack.c.l.b16 %v1070
        %v1363 = vunpack.c.l.b16 %v1071
        %v1364 = vunpack.c.l.b16 %v1072
        %v1365 = vunpack.c.l.b16 %v1073
        %v1366 = vunpack.c.l.b16 %v1074
        %v1367 = vunpack.c.l.b16 %v1075
        %v1368 = vunpack.c.l.b16 %v1076
        %v1369 = vunpack.c.l.b16 %v1077
        %v1370 = vunpack.c.l.b16 %v1078
        %v1371 = vunpack.c.l.b16 %v1079
        %v1372 = vunpack.c.l.b16 %v1080
        %v1373 = vunpack.c.l.b16 %v1081
        %v1374 = vunpack.c.l.b16 %v1082
        %v1375 = vunpack.c.l.b16 %v1083
        %v1376 = vunpack.c.l.b16 %v1084
        %v1377 = vunpack.c.l.b16 %v1085
        %v1378 = vunpack.c.l.b16 %v1086
        %v1379 = vunpack.c.l.b16 %v1087
        %v1380 = vunpack.c.l.b16 %v1088
        %v1381 = vunpack.c.l.b16 %v1089
        %v1382 = vunpack.c.l.b16 %v1090
        %v1383 = vunpack.c.l.b16 %v1091
        %v1384 = vunpack.c.l.b16 %v1092
        %v1385 = vpack.c.b16 %v1242, %v1241
        %v1386 = vpack.c.b16 %v1244, %v1243
        %v1387 = vpack.c.b16 %v1246, %v1245
        %v1388 = vpack.c.b16 %v1248, %v1247
        %v1389 = vpack.c.b16 %v1250, %v1249
        %v1390 = vpack.c.b16 %v1252, %v1251
        %v1391 = vpack.c.b16 %v1254, %v1253
        %v1392 = vpack.c.b16 %v1256, %v1255
        %v1393 = vpack.c.b16 %v1258, %v1257
        %v1394 = vpack.c.b16 %v1260, %v1259
        %v1395 = vpack.c.b16 %v1262, %v1261
        %v1396 = vpack.c.b16 %v1264, %v1263
        %v1397 = vpack.c.b16 %v1266, %v1265
        %v1398 = vpack.c.b16 %v1268, %v1267
        %v1399 = vpack.c.b16 %v1270, %v1269
        %v1400 = vpack.c.b16 %v1272, %v1271
        %v1401 = vpack.c.b16 %v1274, %v1273
        %v1402 = vpack.c.b16 %v1276, %v1275
        %v1403 = vpack.c.b16 %v1278, %v1277
        %v1404 = vpack.c.b16 %v1280, %v1279
        %v1405 = vpack.c.b16 %v1282, %v1281
        %v1406 = vpack.c.b16 %v1284, %v1283
        %v1407 = vpack.c.b16 %v1286, %v1285
        %v1408 = vpack.c.b16 %v1288, %v1287
        %v1409 = vpack.c.b16 %v1290, %v1289
        %v1410 = vpack.c.b16 %v1292, %v1291
        %v1411 = vpack.c.b16 %v1294, %v1293
        %v1412 = vpack.c.b16 %v1296, %v1295
        %v1413 = vpack.c.b16 %v1298, %v1297
        %v1414 = vpack.c.b16 %v1300, %v1299
        %v1415 = vpack.c.b16 %v1302, %v1301
        %v1416 = vpack.c.b16 %v1304, %v1303
        %v1417 = vpack.c.b16 %v1306, %v1305
        %v1418 = vpack.c.b16 %v1308, %v1307
        %v1419 = vpack.c.b16 %v1310, %v1309
        %v1420 = vpack.c.b16 %v1312, %v1311
        %v1421 = vpack.c.b16 %v1314, %v1313
        %v1422 = vpack.c.b16 %v1316, %v1315
        %v1423 = vpack.c.b16 %v1318, %v1317
        %v1424 = vpack.c.b16 %v1320, %v1319
        %v1425 = vpack.c.b16 %v1322, %v1321
        %v1426 = vpack.c.b16 %v1324, %v1323
        %v1427 = vpack.c.b16 %v1326, %v1325
        %v1428 = vpack.c.b16 %v1328, %v1327
        %v1429 = vpack.c.b16 %v1330, %v1329
        %v1430 = vpack.c.b16 %v1332, %v1331
        %v1431 = vpack.c.b16 %v1334, %v1333
        %v1432 = vpack.c.b16 %v1336, %v1335
        %v1433 = vpack.c.b16 %v1338, %v1337
        %v1434 = vpack.c.b16 %v1340, %v1339
        %v1435 = vpack.c.b16 %v1342, %v1341
        %v1436 = vpack.c.b16 %v1344, %v1343
        %v1437 = vpack.c.b16 %v1346, %v1345
        %v1438 = vpack.c.b16 %v1348, %v1347
        %v1439 = vpack.c.b16 %v1350, %v1349
        %v1440 = vpack.c.b16 %v1352, %v1351
        %v1441 = vpack.c.b16 %v1354, %v1353
        %v1442 = vpack.c.b16 %v1356, %v1355
        %v1443 = vpack.c.b16 %v1358, %v1357
        %v1444 = vpack.c.b16 %v1360, %v1359
        %v1445 = vpack.c.b16 %v1362, %v1361
        %v1446 = vpack.c.b16 %v1364, %v1363
        %v1447 = vpack.c.b16 %v1366, %v1365
        %v1448 = vpack.c.b16 %v1368, %v1367
        %v1449 = vpack.c.b16 %v1370, %v1369
        %v1450 = vpack.c.b16 %v1372, %v1371
        %v1451 = vpack.c.b16 %v1374, %v1373
        %v1452 = vpack.c.b16 %v1376, %v1375
        %v1453 = vpack.c.b16 %v1378, %v1377
        %v1454 = vpack.c.b16 %v1380, %v1379
        %v1455 = vpack.c.b16 %v1382, %v1381
        %v1456 = vpack.c.b16 %v1384, %v1383
        %1529 = vmatpush.bf16.msra.mxu0 %v1392
        %1530 = vmatpush.bf16.msra.mxu0 %v1391
        %1531 = vmatpush.bf16.msra.mxu0 %v1390
        %1532 = vmatpush.bf16.msra.mxu0 %v1389
        %1533 = vmatpush.bf16.msra.mxu0 %v1388
        %1534 = vmatpush.bf16.msra.mxu0 %v1387
        %1535 = vmatpush.bf16.msra.mxu0 %v1386
        %1536 = vmatpush.bf16.msra.mxu0 %v1385
        %1537 = vmatmul.bf16.gmra.mxu0 %v797
        %v1538 = vpop.f32.mrf.mxu0
        %v1539 = vadd.f32 %v1095, %v1538
        %v1540 = vpop.f32.mrf.mxu0
        %v1541 = vadd.f32 %v1095, %v1540
        %1542 = vmatmul.bf16.gmra.mxu0 %v798
        %v1543 = vpop.f32.mrf.mxu0
        %v1544 = vadd.f32 %v1095, %v1543
        %v1545 = vpop.f32.mrf.mxu0
        %v1546 = vadd.f32 %v1095, %v1545
        %1547 = vmatmul.bf16.gmra.mxu0 %v799
        %v1548 = vpop.f32.mrf.mxu0
        %v1549 = vadd.f32 %v1095, %v1548
        %v1550 = vpop.f32.mrf.mxu0
        %v1551 = vadd.f32 %v1095, %v1550
        %1552 = vmatmul.bf16.gmra.mxu0 %v800
        %v1553 = vpop.f32.mrf.mxu0
        %v1554 = vadd.f32 %v1095, %v1553
        %v1555 = vpop.f32.mrf.mxu0
        %v1556 = vadd.f32 %v1095, %v1555
        %1557 = vdwg.mxu0
        %1558 = vmatpush.bf16.msra.mxu0 %v1400
        %1559 = vmatpush.bf16.msra.mxu0 %v1399
        %1560 = vmatpush.bf16.msra.mxu0 %v1398
        %1561 = vmatpush.bf16.msra.mxu0 %v1397
        %1562 = vmatpush.bf16.msra.mxu0 %v1396
        %1563 = vmatpush.bf16.msra.mxu0 %v1395
        %1564 = vmatpush.bf16.msra.mxu0 %v1394
        %1565 = vmatpush.bf16.msra.mxu0 %v1393
        %1566 = vmatmul.bf16.gmra.mxu0 %v813
        %v1567 = vpop.f32.mrf.mxu0
        %v1568 = vadd.f32 %v1539, %v1567
        %v1569 = vpop.f32.mrf.mxu0
        %v1570 = vadd.f32 %v1541, %v1569
        %1571 = vmatmul.bf16.gmra.mxu0 %v814
        %v1572 = vpop.f32.mrf.mxu0
        %v1573 = vadd.f32 %v1544, %v1572
        %v1574 = vpop.f32.mrf.mxu0
        %v1575 = vadd.f32 %v1546, %v1574
        %1576 = vmatmul.bf16.gmra.mxu0 %v815
        %v1577 = vpop.f32.mrf.mxu0
        %v1578 = vadd.f32 %v1549, %v1577
        %v1579 = vpop.f32.mrf.mxu0
        %v1580 = vadd.f32 %v1551, %v1579
        %1581 = vmatmul.bf16.gmra.mxu0 %v816
        %v1582 = vpop.f32.mrf.mxu0
        %v1583 = vadd.f32 %v1554, %v1582
        %v1584 = vpop.f32.mrf.mxu0
        %v1585 = vadd.f32 %v1556, %v1584
        %1586 = vdwg.mxu0
        %1587 = vmatpush.bf16.msra.mxu0 %v1408
        %1588 = vmatpush.bf16.msra.mxu0 %v1407
        %1589 = vmatpush.bf16.msra.mxu0 %v1406
        %1590 = vmatpush.bf16.msra.mxu0 %v1405
        %1591 = vmatpush.bf16.msra.mxu0 %v1404
        %1592 = vmatpush.bf16.msra.mxu0 %v1403
        %1593 = vmatpush.bf16.msra.mxu0 %v1402
        %1594 = vmatpush.bf16.msra.mxu0 %v1401
        %1595 = vmatmul.bf16.gmra.mxu0 %v829
        %v1596 = vpop.f32.mrf.mxu0
        %v1597 = vadd.f32 %v1568, %v1596
        %v1598 = vpop.f32.mrf.mxu0
        %v1599 = vadd.f32 %v1570, %v1598
        %1600 = vmatmul.bf16.gmra.mxu0 %v830
        %v1601 = vpop.f32.mrf.mxu0
        %v1602 = vadd.f32 %v1573, %v1601
        %v1603 = vpop.f32.mrf.mxu0
        %v1604 = vadd.f32 %v1575, %v1603
        %1605 = vmatmul.bf16.gmra.mxu0 %v831
        %v1606 = vpop.f32.mrf.mxu0
        %v1607 = vadd.f32 %v1578, %v1606
        %v1608 = vpop.f32.mrf.mxu0
        %v1609 = vadd.f32 %v1580, %v1608
        %1610 = vmatmul.bf16.gmra.mxu0 %v832
        %v1611 = vpop.f32.mrf.mxu0
        %v1612 = vadd.f32 %v1583, %v1611
        %v1613 = vpop.f32.mrf.mxu0
        %v1614 = vadd.f32 %v1585, %v1613
        %1615 = vdwg.mxu0
        %1616 = vmatpush.bf16.msra.mxu0 %v1416
        %1617 = vmatpush.bf16.msra.mxu0 %v1415
        %1618 = vmatpush.bf16.msra.mxu0 %v1414
        %1619 = vmatpush.bf16.msra.mxu0 %v1413
        %1620 = vmatpush.bf16.msra.mxu0 %v1412
        %1621 = vmatpush.bf16.msra.mxu0 %v1411
        %1622 = vmatpush.bf16.msra.mxu0 %v1410
        %1623 = vmatpush.bf16.msra.mxu0 %v1409
        %1624 = vmatmul.bf16.gmra.mxu0 %v853
        %v1625 = vpop.f32.mrf.mxu0
        %v1626 = vadd.f32 %v1597, %v1625
        %v1627 = vpop.f32.mrf.mxu0
        %v1628 = vadd.f32 %v1599, %v1627
        %1629 = vmatmul.bf16.gmra.mxu0 %v854
        %v1630 = vpop.f32.mrf.mxu0
        %v1631 = vadd.f32 %v1602, %v1630
        %v1632 = vpop.f32.mrf.mxu0
        %v1633 = vadd.f32 %v1604, %v1632
        %1634 = vmatmul.bf16.gmra.mxu0 %v855
        %v1635 = vpop.f32.mrf.mxu0
        %v1636 = vadd.f32 %v1607, %v1635
        %v1637 = vpop.f32.mrf.mxu0
        %v1638 = vadd.f32 %v1609, %v1637
        %1639 = vmatmul.bf16.gmra.mxu0 %v856
        %v1640 = vpop.f32.mrf.mxu0
        %v1641 = vadd.f32 %v1612, %v1640
        %v1642 = vpop.f32.mrf.mxu0
        %v1643 = vadd.f32 %v1614, %v1642
        %1644 = vdwg.mxu0
        %1645 = vmatpush.bf16.msra.mxu0 %v1424
        %1646 = vmatpush.bf16.msra.mxu0 %v1423
        %1647 = vmatpush.bf16.msra.mxu0 %v1422
        %1648 = vmatpush.bf16.msra.mxu0 %v1421
        %1649 = vmatpush.bf16.msra.mxu0 %v1420
        %1650 = vmatpush.bf16.msra.mxu0 %v1419
        %1651 = vmatpush.bf16.msra.mxu0 %v1418
        %1652 = vmatpush.bf16.msra.mxu0 %v1417
        %1653 = vmatmul.bf16.gmra.mxu0 %v869
        %v1654 = vpop.f32.mrf.mxu0
        %v1655 = vadd.f32 %v1626, %v1654
        %v1656 = vpop.f32.mrf.mxu0
        %v1657 = vadd.f32 %v1628, %v1656
        %1658 = vmatmul.bf16.gmra.mxu0 %v870
        %v1659 = vpop.f32.mrf.mxu0
        %v1660 = vadd.f32 %v1631, %v1659
        %v1661 = vpop.f32.mrf.mxu0
        %v1662 = vadd.f32 %v1633, %v1661
        %1663 = vmatmul.bf16.gmra.mxu0 %v871
        %v1664 = vpop.f32.mrf.mxu0
        %v1665 = vadd.f32 %v1636, %v1664
        %v1666 = vpop.f32.mrf.mxu0
        %v1667 = vadd.f32 %v1638, %v1666
        %1668 = vmatmul.bf16.gmra.mxu0 %v872
        %v1669 = vpop.f32.mrf.mxu0
        %v1670 = vadd.f32 %v1641, %v1669
        %v1671 = vpop.f32.mrf.mxu0
        %v1672 = vadd.f32 %v1643, %v1671
        %1673 = vdwg.mxu0
        %1674 = vmatpush.bf16.msra.mxu0 %v1432
        %1675 = vmatpush.bf16.msra.mxu0 %v1431
        %1676 = vmatpush.bf16.msra.mxu0 %v1430
        %1677 = vmatpush.bf16.msra.mxu0 %v1429
        %1678 = vmatpush.bf16.msra.mxu0 %v1428
        %1679 = vmatpush.bf16.msra.mxu0 %v1427
        %1680 = vmatpush.bf16.msra.mxu0 %v1426
        %1681 = vmatpush.bf16.msra.mxu0 %v1425
        %1682 = vmatmul.bf16.gmra.mxu0 %v885
        %v1683 = vpop.f32.mrf.mxu0
        %v1684 = vadd.f32 %v1655, %v1683
        %v1685 = vpop.f32.mrf.mxu0
        %v1686 = vadd.f32 %v1657, %v1685
        %1687 = vmatmul.bf16.gmra.mxu0 %v886
        %v1688 = vpop.f32.mrf.mxu0
        %v1689 = vadd.f32 %v1660, %v1688
        %v1690 = vpop.f32.mrf.mxu0
        %v1691 = vadd.f32 %v1662, %v1690
        %1692 = vmatmul.bf16.gmra.mxu0 %v887
        %v1693 = vpop.f32.mrf.mxu0
        %v1694 = vadd.f32 %v1665, %v1693
        %v1695 = vpop.f32.mrf.mxu0
        %v1696 = vadd.f32 %v1667, %v1695
        %1697 = vmatmul.bf16.gmra.mxu0 %v888
        %v1698 = vpop.f32.mrf.mxu0
        %v1699 = vadd.f32 %v1670, %v1698
        %v1700 = vpop.f32.mrf.mxu0
        %v1701 = vadd.f32 %v1672, %v1700
        %1702 = vdwg.mxu0
        %1703 = vmatpush.bf16.msra.mxu0 %v1440
        %1704 = vmatpush.bf16.msra.mxu0 %v1439
        %1705 = vmatpush.bf16.msra.mxu0 %v1438
        %1706 = vmatpush.bf16.msra.mxu0 %v1437
        %1707 = vmatpush.bf16.msra.mxu0 %v1436
        %1708 = vmatpush.bf16.msra.mxu0 %v1435
        %1709 = vmatpush.bf16.msra.mxu0 %v1434
        %1710 = vmatpush.bf16.msra.mxu0 %v1433
        %1711 = vmatmul.bf16.gmra.mxu0 %v909
        %v1712 = vpop.f32.mrf.mxu0
        %v1713 = vadd.f32 %v1684, %v1712
        %v1714 = vpop.f32.mrf.mxu0
        %v1715 = vadd.f32 %v1686, %v1714
        %1716 = vmatmul.bf16.gmra.mxu0 %v910
        %v1717 = vpop.f32.mrf.mxu0
        %v1718 = vadd.f32 %v1689, %v1717
        %v1719 = vpop.f32.mrf.mxu0
        %v1720 = vadd.f32 %v1691, %v1719
        %1721 = vmatmul.bf16.gmra.mxu0 %v911
        %v1722 = vpop.f32.mrf.mxu0
        %v1723 = vadd.f32 %v1694, %v1722
        %v1724 = vpop.f32.mrf.mxu0
        %v1725 = vadd.f32 %v1696, %v1724
        %1726 = vmatmul.bf16.gmra.mxu0 %v912
        %v1727 = vpop.f32.mrf.mxu0
        %v1728 = vadd.f32 %v1699, %v1727
        %v1729 = vpop.f32.mrf.mxu0
        %v1730 = vadd.f32 %v1701, %v1729
        %1731 = vdwg.mxu0
        %1732 = vmatpush.bf16.msra.mxu0 %v1448
        %1733 = vmatpush.bf16.msra.mxu0 %v1447
        %1734 = vmatpush.bf16.msra.mxu0 %v1446
        %1735 = vmatpush.bf16.msra.mxu0 %v1445
        %1736 = vmatpush.bf16.msra.mxu0 %v1444
        %1737 = vmatpush.bf16.msra.mxu0 %v1443
        %1738 = vmatpush.bf16.msra.mxu0 %v1442
        %1739 = vmatpush.bf16.msra.mxu0 %v1441
        %1740 = vmatmul.bf16.gmra.mxu0 %v925
        %v1741 = vpop.f32.mrf.mxu0
        %v1742 = vadd.f32 %v1713, %v1741
        %v1743 = vpop.f32.mrf.mxu0
        %v1744 = vadd.f32 %v1715, %v1743
        %1745 = vmatmul.bf16.gmra.mxu0 %v926
        %v1746 = vpop.f32.mrf.mxu0
        %v1747 = vadd.f32 %v1718, %v1746
        %v1748 = vpop.f32.mrf.mxu0
        %v1749 = vadd.f32 %v1720, %v1748
        %1750 = vmatmul.bf16.gmra.mxu0 %v927
        %v1751 = vpop.f32.mrf.mxu0
        %v1752 = vadd.f32 %v1723, %v1751
        %v1753 = vpop.f32.mrf.mxu0
        %v1754 = vadd.f32 %v1725, %v1753
        %1755 = vmatmul.bf16.gmra.mxu0 %v928
        %v1756 = vpop.f32.mrf.mxu0
        %v1757 = vadd.f32 %v1728, %v1756
        %v1758 = vpop.f32.mrf.mxu0
        %v1759 = vadd.f32 %v1730, %v1758
        %1760 = vdwg.mxu0
        %1761 = vmatpush.bf16.msra.mxu0 %v1456
        %1762 = vmatpush.bf16.msra.mxu0 %v1455
        %1763 = vmatpush.bf16.msra.mxu0 %v1454
        %1764 = vmatpush.bf16.msra.mxu0 %v1453
        %1765 = vmatpush.bf16.msra.mxu0 %v1452
        %1766 = vmatpush.bf16.msra.mxu0 %v1451
        %1767 = vmatpush.bf16.msra.mxu0 %v1450
        %1768 = vmatpush.bf16.msra.mxu0 %v1449
        %1769 = vmatmul.bf16.gmra.mxu0 %v941
        %v1770 = vpop.f32.mrf.mxu0
        %v1771 = vadd.f32 %v1742, %v1770
        %v1772 = vpop.f32.mrf.mxu0
        %v1773 = vadd.f32 %v1744, %v1772
        %1774 = vmatmul.bf16.gmra.mxu0 %v942
        %v1775 = vpop.f32.mrf.mxu0
        %v1776 = vadd.f32 %v1747, %v1775
        %v1777 = vpop.f32.mrf.mxu0
        %v1778 = vadd.f32 %v1749, %v1777
        %1779 = vmatmul.bf16.gmra.mxu0 %v943
        %v1780 = vpop.f32.mrf.mxu0
        %v1781 = vadd.f32 %v1752, %v1780
        %v1782 = vpop.f32.mrf.mxu0
        %v1783 = vadd.f32 %v1754, %v1782
        %1784 = vmatmul.bf16.gmra.mxu0 %v944
        %v1785 = vpop.f32.mrf.mxu0
        %v1786 = vadd.f32 %v1757, %v1785
        %v1787 = vpop.f32.mrf.mxu0
        %v1788 = vadd.f32 %v1759, %v1787
        %1789 = vdwg.mxu0
        %1790 = vst [vmem:[%s212] sm:$0xff] %v1771
        %1791 = vst [vmem:[%s212 + $0x8] sm:$0xff] %v1773
        %1792 = vst [vmem:[%s212 + $0x10] sm:$0xff] %v1776
        %1793 = vst [vmem:[%s212 + $0x18] sm:$0xff] %v1778
        %1794 = vst [vmem:[%s212 + $0x20] sm:$0xff] %v1781
        %1795 = vst [vmem:[%s212 + $0x28] sm:$0xff] %v1783
        %1796 = vst [vmem:[%s212 + $0x30] sm:$0xff] %v1786
        %1797 = vst [vmem:[%s212 + $0x38] sm:$0xff] %v1788
        %s1798 = sand.u32 %s118, 1
        %s1799 = scalar_lea.sflag [#allocation4], %s1798
        %s1800 = sand.u32 %s118, 1
        %s1801 = smul.addr %s1800, 64
        %s1802 = scalar_lea.vmem [#allocation5], %s1801
        // Predicated region
        $region37: #{tpu_custom_call.1} parent=31 // pred_check
          %p1803 = pneg %p128
        $region38: #{tpu_custom_call.1} parent=31 // pred_check_branch
          %1805 = sbr.rel (%p1803) target = $region40
        $region39: #{tpu_custom_call.1} parent=31 // pred_region
          %1807 = vsyncadd %s1799, 0
          %s1808 = smul.addr %s22, 8
          %s1809 = sadd.s32 %s23, %s1808
          %s1810 = smul.addr %s1809, 8
          %s1811 = scalar_lea.hbm %s3, %s1810
          %s1812 = sshll.u32 %s1802, 4
          %s1813 = int_to_ptr.vmem [resolvable:$true] %s1812
          %s1814 = sshll.u32 %s1811, 4
          %s1815 = int_to_ptr.hbm [resolvable:$true] %s1814
          %1820 = dma.vmem_to_hbm [thread:$0]  %s1813, 1024, %s1815, %s1799, 128, 128, 8
        $region40: #{tpu_custom_call.1} parent=31 // pred_fallthru
          _
      $region32: #{tpu_custom_call.1} parent=5 // pred_fallthru
        _
      %p1821 = scmp.le.s32.totalorder 2, %s13
      // Predicated region
      $region41: #{tpu_custom_call.1} parent=5 // pred_check
        %p1822 = pneg %p1821
      $region42: #{tpu_custom_call.1} parent=5 // pred_check_branch
        %1824 = sbr.rel (%p1822) target = $region44
      $region43: #{tpu_custom_call.1} parent=5 // pred_region
        %s1825 = ssub.s32 %s13, 2
        // Predicated region
        $region45: #{tpu_custom_call.1} parent=43 // pred_check
          %p1826 = pneg %p134
        $region46: #{tpu_custom_call.1} parent=43 // pred_check_branch
          %1828 = sbr.rel (%p1826) target = $region48
        $region47: #{tpu_custom_call.1} parent=43 // pred_region
          %s1829 = sand.u32 %s119, 1
          %s1830 = scalar_lea.sflag [#allocation4], %s1829
          %s1831 = sand.u32 %s119, 1
          %s1832 = smul.addr %s1831, 64
          %s1833 = scalar_lea.vmem [#allocation5], %s1832
          %1835 = dma.done %s1830, 1024
        $region48: #{tpu_custom_call.1} parent=43 // pred_fallthru
          _
      $region44: #{tpu_custom_call.1} parent=5 // pred_fallthru
        _
    $region6: #{tpu_custom_call.1} parent=1 // loop_footer
      %s17 = sadd.s32 1, %s13
    $region7: #{tpu_custom_call.1} parent=1 // loop_footer_branch
      %12 = sbr.rel target = $region3
    $region8: #{tpu_custom_call.1} parent=1 // loop_exit
      _
    %1836 = vsyncpa [#allocation3], 1
    %s1837 = scalar_lea.sflag [#allocation3], 1
    %1838 = vsyncpa %s1837, 1
    %1839 = vsyncpa [#allocation4], 1
    %s1840 = scalar_lea.sflag [#allocation4], 1
    %1841 = vsyncpa %s1840, 1

</llo_original>
